<compile_context>
chip_gen: v7x
topology: tpu7x:2x2x1
jax: 0.10.0
libtpu: 0.0.40
codegen_flags: <defaults>
</compile_context>

<pallas_src>
import functools

import jax
import jax.numpy as jnp
from jax.experimental import pallas as pl
from jax.experimental.pallas import tpu as pltpu

KSIZE = 7
PAD = 3
ROW_OFF = 8          # sublane-aligned top halo inside the pooled scratch planes
MAX_UNROLL = 64      # cap on the per-step channel unroll (bounds trace size)


def _round_up(x, m):
    return (x + m - 1) // m * m


def spatial_attention_kernel(x_ref, w_ref, b_ref, o_ref, sum_ref, max_ref, *,
                             C, ragged, single_chunk, h_strip):
    """Grid: (N, ceil(C / TC)); the C axis is last and 'arbitrary'.

    x_ref:   (1, TC, H, W) VMEM  raw input channel chunk (no spatial pre-pad)
    w_ref:   (2*7*7,)      SMEM  conv weight [in_ch, kh, kw]; avg-channel
                                 weights pre-scaled by 1/C in the wrapper
    b_ref:   (1,)          SMEM  conv bias
    o_ref:   (1, 1, H, Wp) VMEM  lane-dense output block (cols >= W garbage)
    sum_ref: (Hs, Wp)      VMEM  running channel sum (== C * avg), zero halo
    max_ref: (Hs, Wp)      VMEM  running channel max, zero halo
    """
    c_step = pl.program_id(1)
    n_c = pl.num_programs(1)

    TC = x_ref.shape[1]
    H = x_ref.shape[2]
    W = x_ref.shape[3]
    Wp = o_ref.shape[3]

    # ---- streamed channel reduction over this chunk (2 partial chains) ----
    psum = [None, None]
    pmax = [None, None]
    for c in range(TC):
        v = x_ref[0, c].astype(jnp.float32)            # one (H, W) plane
        if ragged and c >= C % TC:
            # Ragged last chunk: mask channels past C.  Never zero-pad the
            # channel axis (that would corrupt the max); OOB block contents
            # are unspecified and discarded by the selects below.
            valid = (c_step * TC + c) < C
            v_sum = jnp.where(valid, v, 0.0)
            v_max = jnp.where(valid, v, -jnp.inf)
        else:
            v_sum = v
            v_max = v
        t = c & 1
        psum[t] = v_sum if psum[t] is None else psum[t] + v_sum
        pmax[t] = v_max if pmax[t] is None else jnp.maximum(pmax[t], v_max)
    chunk_sum = psum[0] if psum[1] is None else psum[0] + psum[1]
    chunk_max = pmax[0] if pmax[1] is None else jnp.maximum(pmax[0], pmax[1])

    def seed():
        # Zero the full planes (halo ring included) once per batch element,
        # then seed the interior window from the first chunk.  Megacore safe:
        # every batch element starts at c_step == 0 on its own core.
        sum_ref[...] = jnp.zeros_like(sum_ref)
        max_ref[...] = jnp.zeros_like(max_ref)
        sum_ref[pl.ds(ROW_OFF, H), pl.ds(0, W)] = chunk_sum
        max_ref[pl.ds(ROW_OFF, H), pl.ds(0, W)] = chunk_max

    def accumulate():
        cur_s = sum_ref[pl.ds(ROW_OFF, H), pl.ds(0, W)]
        cur_m = max_ref[pl.ds(ROW_OFF, H), pl.ds(0, W)]
        sum_ref[pl.ds(ROW_OFF, H), pl.ds(0, W)] = cur_s + chunk_sum
        max_ref[pl.ds(ROW_OFF, H), pl.ds(0, W)] = jnp.maximum(cur_m, chunk_max)

    def epilogue():
        # 7x7 conv (2 -> 1) + bias + sigmoid, tiled over H strips to bound
        # vreg pressure.  Lane rolls are hoisted out of the ky loop: one XLU
        # roll per (pooled channel, kx) per strip; the 7 ky bands are then
        # plain row slices of the rolled strip value.
        for h0 in range(0, H, h_strip):
            hs = min(h_strip, H - h0)
            parts = [
                jnp.full((hs, Wp), b_ref[0], dtype=jnp.float32),
                jnp.zeros((hs, Wp), dtype=jnp.float32),
                jnp.zeros((hs, Wp), dtype=jnp.float32),
                jnp.zeros((hs, Wp), dtype=jnp.float32),
            ]
            term = 0
            for ci, plane in enumerate((sum_ref, max_ref)):
                # All rows the 7 vertical taps of this strip touch (the halo
                # rows in the scratch plane are zero == Conv2d zero padding).
                seg = plane[pl.ds(ROW_OFF - PAD + h0, hs + 2 * PAD), :]
                for kx in range(KSIZE):
                    shift = (PAD - kx) % Wp
                    rolled = seg if shift == 0 else pltpu.roll(
                        seg, shift=shift, axis=1)
                    for ky in range(KSIZE):
                        band = rolled[ky:ky + hs, :]
                        w_s = w_ref[ci * KSIZE * KSIZE + ky * KSIZE + kx]
                        parts[term & 3] = parts[term & 3] + w_s * band
                        term += 1
            acc = (parts[0] + parts[1]) + (parts[2] + parts[3])
            o_ref[0, 0, pl.ds(h0, hs), :] = jax.nn.sigmoid(acc).astype(
                o_ref.dtype)

    if single_chunk:
        seed()
        epilogue()
    else:
        pl.when(c_step == 0)(seed)
        pl.when(c_step > 0)(accumulate)
        pl.when(c_step == n_c - 1)(epilogue)


def _pick_tc(C, per_c_bytes, fixed_bytes, vmem_cap, max_tc=None):
    """VMEM-budget-aware channel-chunk size (review #2)."""
    budget = max(int(vmem_cap * 0.6) - fixed_bytes, 2 * per_c_bytes)
    tc = max(1, min(C, budget // (2 * per_c_bytes), MAX_UNROLL))
    if max_tc is not None:
        tc = max(1, min(tc, max_tc))
    if C % tc != 0:
        # Prefer an exact divisor of C when it costs at most ~2x more steps;
        # otherwise keep the ragged last chunk (masked in-kernel).
        div = max(d for d in range(1, tc + 1) if C % d == 0)
        if 2 * div >= tc:
            tc = div
    return tc


def spatial_attention(x, w, b, *, max_tc=None):
    """x: (N, C, H, W); w: (1, 2, 7, 7); b: (1,)  ->  (N, 1, H, W)."""
    N, C, H, W = x.shape

    Wp = _round_up(W + PAD, 128)               # lane-dense pooled-plane width
    Hs = _round_up(ROW_OFF + H + PAD, 8)       # sublane-aligned pooled height

    try:
        vmem_cap = int(pltpu.get_tpu_info().vmem_capacity_bytes)
    except Exception:
        vmem_cap = 64 * 1024 * 1024            # conservative (v7x-sized) default

    itemsize = jnp.dtype(x.dtype).itemsize
    per_c = H * W * itemsize                   # one input channel plane
    out_block = H * Wp * itemsize
    scratch = 2 * Hs * Wp * 4
    fixed = 2 * out_block + scratch

    TC = _pick_tc(C, per_c, fixed, vmem_cap, max_tc=max_tc)
    n_chunks = pl.cdiv(C, TC)
    ragged = (C % TC) != 0

    # Epilogue H-strip size: keep the 4 f32 partial accumulators ~<= 32 vregs.
    h_strip = max(8, (64 * 128 // Wp) // 8 * 8)

    # Fold mean's 1/C into the avg-channel weights (98 floats) so the kernel
    # uses the raw channel sum directly.
    w2 = w.astype(jnp.float32).reshape(2, KSIZE, KSIZE)
    w2 = w2.at[0].multiply(1.0 / C)
    w_flat = w2.reshape(-1)
    b_vec = b.astype(jnp.float32).reshape(1)

    # Chip-aware scoped-VMEM budget (review #3): what we use plus headroom,
    # never more than ~80% of physical VMEM.
    vmem_need = 2 * TC * per_c + fixed
    vmem_limit = int(min(max(vmem_need * 5 // 4 + (1 << 20), 16 * 1024 * 1024),
                         int(vmem_cap * 0.8)))

    kernel = functools.partial(
        spatial_attention_kernel, C=C, ragged=ragged,
        single_chunk=(n_chunks == 1), h_strip=h_strip)

    out_p = pl.pallas_call(
        kernel,
        out_shape=jax.ShapeDtypeStruct((N, 1, H, Wp), x.dtype),
        grid_spec=pltpu.PrefetchScalarGridSpec(
            num_scalar_prefetch=0,
            grid=(N, n_chunks),
            in_specs=[
                pl.BlockSpec((1, TC, H, W), lambda bi, ci: (bi, ci, 0, 0)),
                pl.BlockSpec(memory_space=pltpu.MemorySpace.SMEM),
                pl.BlockSpec(memory_space=pltpu.MemorySpace.SMEM),
            ],
            out_specs=pl.BlockSpec((1, 1, H, Wp), lambda bi, ci: (bi, 0, 0, 0)),
            scratch_shapes=[
                pltpu.VMEM((Hs, Wp), jnp.float32),   # running channel sum
                pltpu.VMEM((Hs, Wp), jnp.float32),   # running channel max
            ],
        ),
        compiler_params=pltpu.CompilerParams(
            dimension_semantics=("parallel", "arbitrary"),
            vmem_limit_bytes=vmem_limit,
        ),
    )(x, w_flat, b_vec)

    # Drop the lane padding (cols >= W of the padded output are garbage).
    return out_p[:, :, :, :W]


def reference(x, w, b):
    """Pure-JAX reference matching the PyTorch module exactly."""
    xf = x.astype(jnp.float32)
    avg = jnp.mean(xf, axis=1, keepdims=True)
    mx = jnp.max(xf, axis=1, keepdims=True)
    cat = jnp.concatenate([avg, mx], axis=1)
    y = jax.lax.conv_general_dilated(
        cat, w.astype(jnp.float32), window_strides=(1, 1),
        padding=((PAD, PAD), (PAD, PAD)),
        dimension_numbers=("NCHW", "OIHW", "NCHW"),
        precision=jax.lax.Precision.HIGHEST)
    return jax.nn.sigmoid(y + b.reshape(1, -1, 1, 1)).astype(x.dtype)


if __name__ == "__main__":
    key = jax.random.PRNGKey(0)
    k_x, k_w, k_b = jax.random.split(key, 3)

    N, C, H, W = 2, 4, 16, 16
    x = jax.random.normal(k_x, (N, C, H, W), dtype=jnp.float32)
    # Conv2d(in=2, out=1, k=7) parameters, deterministic synthetic init.
    w = jax.random.normal(k_w, (1, 2, KSIZE, KSIZE), dtype=jnp.float32) * 0.1
    b = jax.random.normal(k_b, (1,), dtype=jnp.float32) * 0.1

    out = spatial_attention(x, w, b)
    out = jax.block_until_ready(out)
    ref = reference(x, w, b)
    assert out.shape == (N, 1, H, W)
    assert jnp.allclose(out, ref, atol=1e-5, rtol=1e-5), "mismatch vs reference"

    # Also exercise the multi-chunk path (running sum/max across C steps).
    x2 = jax.random.normal(jax.random.PRNGKey(1), (1, 8, 16, 16), jnp.float32)
    out2 = jax.block_until_ready(spatial_attention(x2, w, b, max_tc=4))
    ref2 = reference(x2, w, b)
    assert jnp.allclose(out2, ref2, atol=1e-5, rtol=1e-5), "multi-chunk mismatch"

    print("KERNEL_OK")
</pallas_src>

<mosaic_0001>
module attributes {stable_mosaic.version = 11 : i64} {
  func.func @spatial_attention_kernel(%arg0: i32, %arg1: i32, %arg2: memref<1x4x16x16xf32, #tpu.memory_space<vmem>>, %arg3: memref<98xf32, #tpu.memory_space<smem>>, %arg4: memref<1xf32, #tpu.memory_space<smem>>, %arg5: memref<1x1x16x128xf32, #tpu.memory_space<vmem>>, %arg6: memref<32x128xf32, #tpu.memory_space<vmem>>, %arg7: memref<32x128xf32, #tpu.memory_space<vmem>>) attributes {dimension_semantics = [#tpu.dimension_semantics<parallel>, #tpu.dimension_semantics<arbitrary>], iteration_bounds = array<i64: 2, 1>, scalar_prefetch = 0 : i64, scratch_operands = 2 : i64, tpu.core_type = #tpu.core_type<tc>, window_params = [{transform_indices = @transform_0, window_bounds = array<i64: 1, 4, 16, 16>}, {transform_indices = @transform_1, window_bounds = array<i64: 98>}, {transform_indices = @transform_2, window_bounds = array<i64: 1>}, {transform_indices = @transform_3, window_bounds = array<i64: 1, 1, 16, 128>}]} {
    %c0 = arith.constant 0 : index
    %c0_0 = arith.constant 0 : index
    %c0_1 = arith.constant 0 : index
    %c0_2 = arith.constant 0 : index
    %0 = vector.load %arg2[%c0, %c0_0, %c0_1, %c0_2] : memref<1x4x16x16xf32, #tpu.memory_space<vmem>>, vector<1x1x16x16xf32>
    %1 = vector.shape_cast %0 : vector<1x1x16x16xf32> to vector<16x16xf32>
    %c0_3 = arith.constant 0 : index
    %c1 = arith.constant 1 : index
    %c0_4 = arith.constant 0 : index
    %c0_5 = arith.constant 0 : index
    %2 = vector.load %arg2[%c0_3, %c1, %c0_4, %c0_5] : memref<1x4x16x16xf32, #tpu.memory_space<vmem>>, vector<1x1x16x16xf32>
    %3 = vector.shape_cast %2 : vector<1x1x16x16xf32> to vector<16x16xf32>
    %c0_6 = arith.constant 0 : index
    %c2 = arith.constant 2 : index
    %c0_7 = arith.constant 0 : index
    %c0_8 = arith.constant 0 : index
    %4 = vector.load %arg2[%c0_6, %c2, %c0_7, %c0_8] : memref<1x4x16x16xf32, #tpu.memory_space<vmem>>, vector<1x1x16x16xf32>
    %5 = vector.shape_cast %4 : vector<1x1x16x16xf32> to vector<16x16xf32>
    %6 = arith.addf %1, %5 : vector<16x16xf32>
    %7 = arith.maximumf %1, %5 : vector<16x16xf32>
    %c0_9 = arith.constant 0 : index
    %c3 = arith.constant 3 : index
    %c0_10 = arith.constant 0 : index
    %c0_11 = arith.constant 0 : index
    %8 = vector.load %arg2[%c0_9, %c3, %c0_10, %c0_11] : memref<1x4x16x16xf32, #tpu.memory_space<vmem>>, vector<1x1x16x16xf32>
    %9 = vector.shape_cast %8 : vector<1x1x16x16xf32> to vector<16x16xf32>
    %10 = arith.addf %3, %9 : vector<16x16xf32>
    %11 = arith.maximumf %3, %9 : vector<16x16xf32>
    %12 = arith.addf %6, %10 : vector<16x16xf32>
    %13 = arith.maximumf %7, %11 : vector<16x16xf32>
    %cst = arith.constant 0.000000e+00 : f32
    %14 = vector.broadcast %cst : f32 to vector<32x128xf32>
    %c0_12 = arith.constant 0 : index
    %c0_13 = arith.constant 0 : index
    %15 = vector.load %arg6[%c0_12, %c0_13] : memref<32x128xf32, #tpu.memory_space<vmem>>, vector<32x128xf32>
    tpu.vector_store %arg6[%c0_12, %c0_13], %14 {strides = array<i32>} : memref<32x128xf32, #tpu.memory_space<vmem>>, vector<32x128xf32>,
    %cst_14 = arith.constant 0.000000e+00 : f32
    %16 = vector.broadcast %cst_14 : f32 to vector<32x128xf32>
    %c0_15 = arith.constant 0 : index
    %c0_16 = arith.constant 0 : index
    %17 = vector.load %arg7[%c0_15, %c0_16] : memref<32x128xf32, #tpu.memory_space<vmem>>, vector<32x128xf32>
    tpu.vector_store %arg7[%c0_15, %c0_16], %16 {strides = array<i32>} : memref<32x128xf32, #tpu.memory_space<vmem>>, vector<32x128xf32>,
    %c8 = arith.constant 8 : index
    %c0_17 = arith.constant 0 : index
    %18 = vector.load %arg6[%c8, %c0_17] : memref<32x128xf32, #tpu.memory_space<vmem>>, vector<16x16xf32>
    tpu.vector_store %arg6[%c8, %c0_17], %12 {strides = array<i32>} : memref<32x128xf32, #tpu.memory_space<vmem>>, vector<16x16xf32>,
    %c8_18 = arith.constant 8 : index
    %c0_19 = arith.constant 0 : index
    %19 = vector.load %arg7[%c8_18, %c0_19] : memref<32x128xf32, #tpu.memory_space<vmem>>, vector<16x16xf32>
    tpu.vector_store %arg7[%c8_18, %c0_19], %13 {strides = array<i32>} : memref<32x128xf32, #tpu.memory_space<vmem>>, vector<16x16xf32>,
    %c0_20 = arith.constant 0 : index
    %20 = memref.load %arg4[%c0_20] : memref<1xf32, #tpu.memory_space<smem>>
    %21 = vector.broadcast %20 : f32 to vector<16x128xf32>
    %cst_21 = arith.constant 0.000000e+00 : f32
    %22 = vector.broadcast %cst_21 : f32 to vector<16x128xf32>
    %cst_22 = arith.constant 0.000000e+00 : f32
    %23 = vector.broadcast %cst_22 : f32 to vector<16x128xf32>
    %cst_23 = arith.constant 0.000000e+00 : f32
    %24 = vector.broadcast %cst_23 : f32 to vector<16x128xf32>
    %c5 = arith.constant 5 : index
    %c0_24 = arith.constant 0 : index
    %25 = vector.load %arg6[%c5, %c0_24] : memref<32x128xf32, #tpu.memory_space<vmem>>, vector<22x128xf32>
    %c3_i32 = arith.constant 3 : i32
    %26 = tpu.dynamic_rotate %25 by %c3_i32 dim 1 : vector<22x128xf32>, i32 -> vector<22x128xf32>
    %27 = vector.extract_strided_slice %26 {offsets = [0, 0], sizes = [16, 128], strides = [1, 1]} : vector<22x128xf32> to vector<16x128xf32>
    %c0_25 = arith.constant 0 : index
    %28 = memref.load %arg3[%c0_25] : memref<98xf32, #tpu.memory_space<smem>>
    %29 = vector.broadcast %28 : f32 to vector<16x128xf32>
    %30 = arith.mulf %29, %27 : vector<16x128xf32>
    %31 = arith.addf %21, %30 : vector<16x128xf32>
    %32 = vector.extract_strided_slice %26 {offsets = [1, 0], sizes = [16, 128], strides = [1, 1]} : vector<22x128xf32> to vector<16x128xf32>
    %c7 = arith.constant 7 : index
    %33 = memref.load %arg3[%c7] : memref<98xf32, #tpu.memory_space<smem>>
    %34 = vector.broadcast %33 : f32 to vector<16x128xf32>
    %35 = arith.mulf %34, %32 : vector<16x128xf32>
    %36 = arith.addf %22, %35 : vector<16x128xf32>
    %37 = vector.extract_strided_slice %26 {offsets = [2, 0], sizes = [16, 128], strides = [1, 1]} : vector<22x128xf32> to vector<16x128xf32>
    %c14 = arith.constant 14 : index
    %38 = memref.load %arg3[%c14] : memref<98xf32, #tpu.memory_space<smem>>
    %39 = vector.broadcast %38 : f32 to vector<16x128xf32>
    %40 = arith.mulf %39, %37 : vector<16x128xf32>
    %41 = arith.addf %23, %40 : vector<16x128xf32>
    %42 = vector.extract_strided_slice %26 {offsets = [3, 0], sizes = [16, 128], strides = [1, 1]} : vector<22x128xf32> to vector<16x128xf32>
    %c21 = arith.constant 21 : index
    %43 = memref.load %arg3[%c21] : memref<98xf32, #tpu.memory_space<smem>>
    %44 = vector.broadcast %43 : f32 to vector<16x128xf32>
    %45 = arith.mulf %44, %42 : vector<16x128xf32>
    %46 = arith.addf %24, %45 : vector<16x128xf32>
    %47 = vector.extract_strided_slice %26 {offsets = [4, 0], sizes = [16, 128], strides = [1, 1]} : vector<22x128xf32> to vector<16x128xf32>
    %c28 = arith.constant 28 : index
    %48 = memref.load %arg3[%c28] : memref<98xf32, #tpu.memory_space<smem>>
    %49 = vector.broadcast %48 : f32 to vector<16x128xf32>
    %50 = arith.mulf %49, %47 : vector<16x128xf32>
    %51 = arith.addf %31, %50 : vector<16x128xf32>
    %52 = vector.extract_strided_slice %26 {offsets = [5, 0], sizes = [16, 128], strides = [1, 1]} : vector<22x128xf32> to vector<16x128xf32>
    %c35 = arith.constant 35 : index
    %53 = memref.load %arg3[%c35] : memref<98xf32, #tpu.memory_space<smem>>
    %54 = vector.broadcast %53 : f32 to vector<16x128xf32>
    %55 = arith.mulf %54, %52 : vector<16x128xf32>
    %56 = arith.addf %36, %55 : vector<16x128xf32>
    %57 = vector.extract_strided_slice %26 {offsets = [6, 0], sizes = [16, 128], strides = [1, 1]} : vector<22x128xf32> to vector<16x128xf32>
    %c42 = arith.constant 42 : index
    %58 = memref.load %arg3[%c42] : memref<98xf32, #tpu.memory_space<smem>>
    %59 = vector.broadcast %58 : f32 to vector<16x128xf32>
    %60 = arith.mulf %59, %57 : vector<16x128xf32>
    %61 = arith.addf %41, %60 : vector<16x128xf32>
    %c2_i32 = arith.constant 2 : i32
    %62 = tpu.dynamic_rotate %25 by %c2_i32 dim 1 : vector<22x128xf32>, i32 -> vector<22x128xf32>
    %63 = vector.extract_strided_slice %62 {offsets = [0, 0], sizes = [16, 128], strides = [1, 1]} : vector<22x128xf32> to vector<16x128xf32>
    %c1_26 = arith.constant 1 : index
    %64 = memref.load %arg3[%c1_26] : memref<98xf32, #tpu.memory_space<smem>>
    %65 = vector.broadcast %64 : f32 to vector<16x128xf32>
    %66 = arith.mulf %65, %63 : vector<16x128xf32>
    %67 = arith.addf %46, %66 : vector<16x128xf32>
    %68 = vector.extract_strided_slice %62 {offsets = [1, 0], sizes = [16, 128], strides = [1, 1]} : vector<22x128xf32> to vector<16x128xf32>
    %c8_27 = arith.constant 8 : index
    %69 = memref.load %arg3[%c8_27] : memref<98xf32, #tpu.memory_space<smem>>
    %70 = vector.broadcast %69 : f32 to vector<16x128xf32>
    %71 = arith.mulf %70, %68 : vector<16x128xf32>
    %72 = arith.addf %51, %71 : vector<16x128xf32>
    %73 = vector.extract_strided_slice %62 {offsets = [2, 0], sizes = [16, 128], strides = [1, 1]} : vector<22x128xf32> to vector<16x128xf32>
    %c15 = arith.constant 15 : index
    %74 = memref.load %arg3[%c15] : memref<98xf32, #tpu.memory_space<smem>>
    %75 = vector.broadcast %74 : f32 to vector<16x128xf32>
    %76 = arith.mulf %75, %73 : vector<16x128xf32>
    %77 = arith.addf %56, %76 : vector<16x128xf32>
    %78 = vector.extract_strided_slice %62 {offsets = [3, 0], sizes = [16, 128], strides = [1, 1]} : vector<22x128xf32> to vector<16x128xf32>
    %c22 = arith.constant 22 : index
    %79 = memref.load %arg3[%c22] : memref<98xf32, #tpu.memory_space<smem>>
    %80 = vector.broadcast %79 : f32 to vector<16x128xf32>
    %81 = arith.mulf %80, %78 : vector<16x128xf32>
    %82 = arith.addf %61, %81 : vector<16x128xf32>
    %83 = vector.extract_strided_slice %62 {offsets = [4, 0], sizes = [16, 128], strides = [1, 1]} : vector<22x128xf32> to vector<16x128xf32>
    %c29 = arith.constant 29 : index
    %84 = memref.load %arg3[%c29] : memref<98xf32, #tpu.memory_space<smem>>
    %85 = vector.broadcast %84 : f32 to vector<16x128xf32>
    %86 = arith.mulf %85, %83 : vector<16x128xf32>
    %87 = arith.addf %67, %86 : vector<16x128xf32>
    %88 = vector.extract_strided_slice %62 {offsets = [5, 0], sizes = [16, 128], strides = [1, 1]} : vector<22x128xf32> to vector<16x128xf32>
    %c36 = arith.constant 36 : index
    %89 = memref.load %arg3[%c36] : memref<98xf32, #tpu.memory_space<smem>>
    %90 = vector.broadcast %89 : f32 to vector<16x128xf32>
    %91 = arith.mulf %90, %88 : vector<16x128xf32>
    %92 = arith.addf %72, %91 : vector<16x128xf32>
    %93 = vector.extract_strided_slice %62 {offsets = [6, 0], sizes = [16, 128], strides = [1, 1]} : vector<22x128xf32> to vector<16x128xf32>
    %c43 = arith.constant 43 : index
    %94 = memref.load %arg3[%c43] : memref<98xf32, #tpu.memory_space<smem>>
    %95 = vector.broadcast %94 : f32 to vector<16x128xf32>
    %96 = arith.mulf %95, %93 : vector<16x128xf32>
    %97 = arith.addf %77, %96 : vector<16x128xf32>
    %c1_i32 = arith.constant 1 : i32
    %98 = tpu.dynamic_rotate %25 by %c1_i32 dim 1 : vector<22x128xf32>, i32 -> vector<22x128xf32>
    %99 = vector.extract_strided_slice %98 {offsets = [0, 0], sizes = [16, 128], strides = [1, 1]} : vector<22x128xf32> to vector<16x128xf32>
    %c2_28 = arith.constant 2 : index
    %100 = memref.load %arg3[%c2_28] : memref<98xf32, #tpu.memory_space<smem>>
    %101 = vector.broadcast %100 : f32 to vector<16x128xf32>
    %102 = arith.mulf %101, %99 : vector<16x128xf32>
    %103 = arith.addf %82, %102 : vector<16x128xf32>
    %104 = vector.extract_strided_slice %98 {offsets = [1, 0], sizes = [16, 128], strides = [1, 1]} : vector<22x128xf32> to vector<16x128xf32>
    %c9 = arith.constant 9 : index
    %105 = memref.load %arg3[%c9] : memref<98xf32, #tpu.memory_space<smem>>
    %106 = vector.broadcast %105 : f32 to vector<16x128xf32>
    %107 = arith.mulf %106, %104 : vector<16x128xf32>
    %108 = arith.addf %87, %107 : vector<16x128xf32>
    %109 = vector.extract_strided_slice %98 {offsets = [2, 0], sizes = [16, 128], strides = [1, 1]} : vector<22x128xf32> to vector<16x128xf32>
    %c16 = arith.constant 16 : index
    %110 = memref.load %arg3[%c16] : memref<98xf32, #tpu.memory_space<smem>>
    %111 = vector.broadcast %110 : f32 to vector<16x128xf32>
    %112 = arith.mulf %111, %109 : vector<16x128xf32>
    %113 = arith.addf %92, %112 : vector<16x128xf32>
    %114 = vector.extract_strided_slice %98 {offsets = [3, 0], sizes = [16, 128], strides = [1, 1]} : vector<22x128xf32> to vector<16x128xf32>
    %c23 = arith.constant 23 : index
    %115 = memref.load %arg3[%c23] : memref<98xf32, #tpu.memory_space<smem>>
    %116 = vector.broadcast %115 : f32 to vector<16x128xf32>
    %117 = arith.mulf %116, %114 : vector<16x128xf32>
    %118 = arith.addf %97, %117 : vector<16x128xf32>
    %119 = vector.extract_strided_slice %98 {offsets = [4, 0], sizes = [16, 128], strides = [1, 1]} : vector<22x128xf32> to vector<16x128xf32>
    %c30 = arith.constant 30 : index
    %120 = memref.load %arg3[%c30] : memref<98xf32, #tpu.memory_space<smem>>
    %121 = vector.broadcast %120 : f32 to vector<16x128xf32>
    %122 = arith.mulf %121, %119 : vector<16x128xf32>
    %123 = arith.addf %103, %122 : vector<16x128xf32>
    %124 = vector.extract_strided_slice %98 {offsets = [5, 0], sizes = [16, 128], strides = [1, 1]} : vector<22x128xf32> to vector<16x128xf32>
    %c37 = arith.constant 37 : index
    %125 = memref.load %arg3[%c37] : memref<98xf32, #tpu.memory_space<smem>>
    %126 = vector.broadcast %125 : f32 to vector<16x128xf32>
    %127 = arith.mulf %126, %124 : vector<16x128xf32>
    %128 = arith.addf %108, %127 : vector<16x128xf32>
    %129 = vector.extract_strided_slice %98 {offsets = [6, 0], sizes = [16, 128], strides = [1, 1]} : vector<22x128xf32> to vector<16x128xf32>
    %c44 = arith.constant 44 : index
    %130 = memref.load %arg3[%c44] : memref<98xf32, #tpu.memory_space<smem>>
    %131 = vector.broadcast %130 : f32 to vector<16x128xf32>
    %132 = arith.mulf %131, %129 : vector<16x128xf32>
    %133 = arith.addf %113, %132 : vector<16x128xf32>
    %134 = vector.extract_strided_slice %25 {offsets = [0, 0], sizes = [16, 128], strides = [1, 1]} : vector<22x128xf32> to vector<16x128xf32>
    %c3_29 = arith.constant 3 : index
    %135 = memref.load %arg3[%c3_29] : memref<98xf32, #tpu.memory_space<smem>>
    %136 = vector.broadcast %135 : f32 to vector<16x128xf32>
    %137 = arith.mulf %136, %134 : vector<16x128xf32>
    %138 = arith.addf %118, %137 : vector<16x128xf32>
    %139 = vector.extract_strided_slice %25 {offsets = [1, 0], sizes = [16, 128], strides = [1, 1]} : vector<22x128xf32> to vector<16x128xf32>
    %c10 = arith.constant 10 : index
    %140 = memref.load %arg3[%c10] : memref<98xf32, #tpu.memory_space<smem>>
    %141 = vector.broadcast %140 : f32 to vector<16x128xf32>
    %142 = arith.mulf %141, %139 : vector<16x128xf32>
    %143 = arith.addf %123, %142 : vector<16x128xf32>
    %144 = vector.extract_strided_slice %25 {offsets = [2, 0], sizes = [16, 128], strides = [1, 1]} : vector<22x128xf32> to vector<16x128xf32>
    %c17 = arith.constant 17 : index
    %145 = memref.load %arg3[%c17] : memref<98xf32, #tpu.memory_space<smem>>
    %146 = vector.broadcast %145 : f32 to vector<16x128xf32>
    %147 = arith.mulf %146, %144 : vector<16x128xf32>
    %148 = arith.addf %128, %147 : vector<16x128xf32>
    %149 = vector.extract_strided_slice %25 {offsets = [3, 0], sizes = [16, 128], strides = [1, 1]} : vector<22x128xf32> to vector<16x128xf32>
    %c24 = arith.constant 24 : index
    %150 = memref.load %arg3[%c24] : memref<98xf32, #tpu.memory_space<smem>>
    %151 = vector.broadcast %150 : f32 to vector<16x128xf32>
    %152 = arith.mulf %151, %149 : vector<16x128xf32>
    %153 = arith.addf %133, %152 : vector<16x128xf32>
    %154 = vector.extract_strided_slice %25 {offsets = [4, 0], sizes = [16, 128], strides = [1, 1]} : vector<22x128xf32> to vector<16x128xf32>
    %c31 = arith.constant 31 : index
    %155 = memref.load %arg3[%c31] : memref<98xf32, #tpu.memory_space<smem>>
    %156 = vector.broadcast %155 : f32 to vector<16x128xf32>
    %157 = arith.mulf %156, %154 : vector<16x128xf32>
    %158 = arith.addf %138, %157 : vector<16x128xf32>
    %159 = vector.extract_strided_slice %25 {offsets = [5, 0], sizes = [16, 128], strides = [1, 1]} : vector<22x128xf32> to vector<16x128xf32>
    %c38 = arith.constant 38 : index
    %160 = memref.load %arg3[%c38] : memref<98xf32, #tpu.memory_space<smem>>
    %161 = vector.broadcast %160 : f32 to vector<16x128xf32>
    %162 = arith.mulf %161, %159 : vector<16x128xf32>
    %163 = arith.addf %143, %162 : vector<16x128xf32>
    %164 = vector.extract_strided_slice %25 {offsets = [6, 0], sizes = [16, 128], strides = [1, 1]} : vector<22x128xf32> to vector<16x128xf32>
    %c45 = arith.constant 45 : index
    %165 = memref.load %arg3[%c45] : memref<98xf32, #tpu.memory_space<smem>>
    %166 = vector.broadcast %165 : f32 to vector<16x128xf32>
    %167 = arith.mulf %166, %164 : vector<16x128xf32>
    %168 = arith.addf %148, %167 : vector<16x128xf32>
    %c127_i32 = arith.constant 127 : i32
    %169 = tpu.dynamic_rotate %25 by %c127_i32 dim 1 : vector<22x128xf32>, i32 -> vector<22x128xf32>
    %170 = vector.extract_strided_slice %169 {offsets = [0, 0], sizes = [16, 128], strides = [1, 1]} : vector<22x128xf32> to vector<16x128xf32>
    %c4 = arith.constant 4 : index
    %171 = memref.load %arg3[%c4] : memref<98xf32, #tpu.memory_space<smem>>
    %172 = vector.broadcast %171 : f32 to vector<16x128xf32>
    %173 = arith.mulf %172, %170 : vector<16x128xf32>
    %174 = arith.addf %153, %173 : vector<16x128xf32>
    %175 = vector.extract_strided_slice %169 {offsets = [1, 0], sizes = [16, 128], strides = [1, 1]} : vector<22x128xf32> to vector<16x128xf32>
    %c11 = arith.constant 11 : index
    %176 = memref.load %arg3[%c11] : memref<98xf32, #tpu.memory_space<smem>>
    %177 = vector.broadcast %176 : f32 to vector<16x128xf32>
    %178 = arith.mulf %177, %175 : vector<16x128xf32>
    %179 = arith.addf %158, %178 : vector<16x128xf32>
    %180 = vector.extract_strided_slice %169 {offsets = [2, 0], sizes = [16, 128], strides = [1, 1]} : vector<22x128xf32> to vector<16x128xf32>
    %c18 = arith.constant 18 : index
    %181 = memref.load %arg3[%c18] : memref<98xf32, #tpu.memory_space<smem>>
    %182 = vector.broadcast %181 : f32 to vector<16x128xf32>
    %183 = arith.mulf %182, %180 : vector<16x128xf32>
    %184 = arith.addf %163, %183 : vector<16x128xf32>
    %185 = vector.extract_strided_slice %169 {offsets = [3, 0], sizes = [16, 128], strides = [1, 1]} : vector<22x128xf32> to vector<16x128xf32>
    %c25 = arith.constant 25 : index
    %186 = memref.load %arg3[%c25] : memref<98xf32, #tpu.memory_space<smem>>
    %187 = vector.broadcast %186 : f32 to vector<16x128xf32>
    %188 = arith.mulf %187, %185 : vector<16x128xf32>
    %189 = arith.addf %168, %188 : vector<16x128xf32>
    %190 = vector.extract_strided_slice %169 {offsets = [4, 0], sizes = [16, 128], strides = [1, 1]} : vector<22x128xf32> to vector<16x128xf32>
    %c32 = arith.constant 32 : index
    %191 = memref.load %arg3[%c32] : memref<98xf32, #tpu.memory_space<smem>>
    %192 = vector.broadcast %191 : f32 to vector<16x128xf32>
    %193 = arith.mulf %192, %190 : vector<16x128xf32>
    %194 = arith.addf %174, %193 : vector<16x128xf32>
    %195 = vector.extract_strided_slice %169 {offsets = [5, 0], sizes = [16, 128], strides = [1, 1]} : vector<22x128xf32> to vector<16x128xf32>
    %c39 = arith.constant 39 : index
    %196 = memref.load %arg3[%c39] : memref<98xf32, #tpu.memory_space<smem>>
    %197 = vector.broadcast %196 : f32 to vector<16x128xf32>
    %198 = arith.mulf %197, %195 : vector<16x128xf32>
    %199 = arith.addf %179, %198 : vector<16x128xf32>
    %200 = vector.extract_strided_slice %169 {offsets = [6, 0], sizes = [16, 128], strides = [1, 1]} : vector<22x128xf32> to vector<16x128xf32>
    %c46 = arith.constant 46 : index
    %201 = memref.load %arg3[%c46] : memref<98xf32, #tpu.memory_space<smem>>
    %202 = vector.broadcast %201 : f32 to vector<16x128xf32>
    %203 = arith.mulf %202, %200 : vector<16x128xf32>
    %204 = arith.addf %184, %203 : vector<16x128xf32>
    %c126_i32 = arith.constant 126 : i32
    %205 = tpu.dynamic_rotate %25 by %c126_i32 dim 1 : vector<22x128xf32>, i32 -> vector<22x128xf32>
    %206 = vector.extract_strided_slice %205 {offsets = [0, 0], sizes = [16, 128], strides = [1, 1]} : vector<22x128xf32> to vector<16x128xf32>
    %c5_30 = arith.constant 5 : index
    %207 = memref.load %arg3[%c5_30] : memref<98xf32, #tpu.memory_space<smem>>
    %208 = vector.broadcast %207 : f32 to vector<16x128xf32>
    %209 = arith.mulf %208, %206 : vector<16x128xf32>
    %210 = arith.addf %189, %209 : vector<16x128xf32>
    %211 = vector.extract_strided_slice %205 {offsets = [1, 0], sizes = [16, 128], strides = [1, 1]} : vector<22x128xf32> to vector<16x128xf32>
    %c12 = arith.constant 12 : index
    %212 = memref.load %arg3[%c12] : memref<98xf32, #tpu.memory_space<smem>>
    %213 = vector.broadcast %212 : f32 to vector<16x128xf32>
    %214 = arith.mulf %213, %211 : vector<16x128xf32>
    %215 = arith.addf %194, %214 : vector<16x128xf32>
    %216 = vector.extract_strided_slice %205 {offsets = [2, 0], sizes = [16, 128], strides = [1, 1]} : vector<22x128xf32> to vector<16x128xf32>
    %c19 = arith.constant 19 : index
    %217 = memref.load %arg3[%c19] : memref<98xf32, #tpu.memory_space<smem>>
    %218 = vector.broadcast %217 : f32 to vector<16x128xf32>
    %219 = arith.mulf %218, %216 : vector<16x128xf32>
    %220 = arith.addf %199, %219 : vector<16x128xf32>
    %221 = vector.extract_strided_slice %205 {offsets = [3, 0], sizes = [16, 128], strides = [1, 1]} : vector<22x128xf32> to vector<16x128xf32>
    %c26 = arith.constant 26 : index
    %222 = memref.load %arg3[%c26] : memref<98xf32, #tpu.memory_space<smem>>
    %223 = vector.broadcast %222 : f32 to vector<16x128xf32>
    %224 = arith.mulf %223, %221 : vector<16x128xf32>
    %225 = arith.addf %204, %224 : vector<16x128xf32>
    %226 = vector.extract_strided_slice %205 {offsets = [4, 0], sizes = [16, 128], strides = [1, 1]} : vector<22x128xf32> to vector<16x128xf32>
    %c33 = arith.constant 33 : index
    %227 = memref.load %arg3[%c33] : memref<98xf32, #tpu.memory_space<smem>>
    %228 = vector.broadcast %227 : f32 to vector<16x128xf32>
    %229 = arith.mulf %228, %226 : vector<16x128xf32>
    %230 = arith.addf %210, %229 : vector<16x128xf32>
    %231 = vector.extract_strided_slice %205 {offsets = [5, 0], sizes = [16, 128], strides = [1, 1]} : vector<22x128xf32> to vector<16x128xf32>
    %c40 = arith.constant 40 : index
    %232 = memref.load %arg3[%c40] : memref<98xf32, #tpu.memory_space<smem>>
    %233 = vector.broadcast %232 : f32 to vector<16x128xf32>
    %234 = arith.mulf %233, %231 : vector<16x128xf32>
    %235 = arith.addf %215, %234 : vector<16x128xf32>
    %236 = vector.extract_strided_slice %205 {offsets = [6, 0], sizes = [16, 128], strides = [1, 1]} : vector<22x128xf32> to vector<16x128xf32>
    %c47 = arith.constant 47 : index
    %237 = memref.load %arg3[%c47] : memref<98xf32, #tpu.memory_space<smem>>
    %238 = vector.broadcast %237 : f32 to vector<16x128xf32>
    %239 = arith.mulf %238, %236 : vector<16x128xf32>
    %240 = arith.addf %220, %239 : vector<16x128xf32>
    %c125_i32 = arith.constant 125 : i32
    %241 = tpu.dynamic_rotate %25 by %c125_i32 dim 1 : vector<22x128xf32>, i32 -> vector<22x128xf32>
    %242 = vector.extract_strided_slice %241 {offsets = [0, 0], sizes = [16, 128], strides = [1, 1]} : vector<22x128xf32> to vector<16x128xf32>
    %c6 = arith.constant 6 : index
    %243 = memref.load %arg3[%c6] : memref<98xf32, #tpu.memory_space<smem>>
    %244 = vector.broadcast %243 : f32 to vector<16x128xf32>
    %245 = arith.mulf %244, %242 : vector<16x128xf32>
    %246 = arith.addf %225, %245 : vector<16x128xf32>
    %247 = vector.extract_strided_slice %241 {offsets = [1, 0], sizes = [16, 128], strides = [1, 1]} : vector<22x128xf32> to vector<16x128xf32>
    %c13 = arith.constant 13 : index
    %248 = memref.load %arg3[%c13] : memref<98xf32, #tpu.memory_space<smem>>
    %249 = vector.broadcast %248 : f32 to vector<16x128xf32>
    %250 = arith.mulf %249, %247 : vector<16x128xf32>
    %251 = arith.addf %230, %250 : vector<16x128xf32>
    %252 = vector.extract_strided_slice %241 {offsets = [2, 0], sizes = [16, 128], strides = [1, 1]} : vector<22x128xf32> to vector<16x128xf32>
    %c20 = arith.constant 20 : index
    %253 = memref.load %arg3[%c20] : memref<98xf32, #tpu.memory_space<smem>>
    %254 = vector.broadcast %253 : f32 to vector<16x128xf32>
    %255 = arith.mulf %254, %252 : vector<16x128xf32>
    %256 = arith.addf %235, %255 : vector<16x128xf32>
    %257 = vector.extract_strided_slice %241 {offsets = [3, 0], sizes = [16, 128], strides = [1, 1]} : vector<22x128xf32> to vector<16x128xf32>
    %c27 = arith.constant 27 : index
    %258 = memref.load %arg3[%c27] : memref<98xf32, #tpu.memory_space<smem>>
    %259 = vector.broadcast %258 : f32 to vector<16x128xf32>
    %260 = arith.mulf %259, %257 : vector<16x128xf32>
    %261 = arith.addf %240, %260 : vector<16x128xf32>
    %262 = vector.extract_strided_slice %241 {offsets = [4, 0], sizes = [16, 128], strides = [1, 1]} : vector<22x128xf32> to vector<16x128xf32>
    %c34 = arith.constant 34 : index
    %263 = memref.load %arg3[%c34] : memref<98xf32, #tpu.memory_space<smem>>
    %264 = vector.broadcast %263 : f32 to vector<16x128xf32>
    %265 = arith.mulf %264, %262 : vector<16x128xf32>
    %266 = arith.addf %246, %265 : vector<16x128xf32>
    %267 = vector.extract_strided_slice %241 {offsets = [5, 0], sizes = [16, 128], strides = [1, 1]} : vector<22x128xf32> to vector<16x128xf32>
    %c41 = arith.constant 41 : index
    %268 = memref.load %arg3[%c41] : memref<98xf32, #tpu.memory_space<smem>>
    %269 = vector.broadcast %268 : f32 to vector<16x128xf32>
    %270 = arith.mulf %269, %267 : vector<16x128xf32>
    %271 = arith.addf %251, %270 : vector<16x128xf32>
    %272 = vector.extract_strided_slice %241 {offsets = [6, 0], sizes = [16, 128], strides = [1, 1]} : vector<22x128xf32> to vector<16x128xf32>
    %c48 = arith.constant 48 : index
    %273 = memref.load %arg3[%c48] : memref<98xf32, #tpu.memory_space<smem>>
    %274 = vector.broadcast %273 : f32 to vector<16x128xf32>
    %275 = arith.mulf %274, %272 : vector<16x128xf32>
    %276 = arith.addf %256, %275 : vector<16x128xf32>
    %c5_31 = arith.constant 5 : index
    %c0_32 = arith.constant 0 : index
    %277 = vector.load %arg7[%c5_31, %c0_32] : memref<32x128xf32, #tpu.memory_space<vmem>>, vector<22x128xf32>
    %c3_i32_33 = arith.constant 3 : i32
    %278 = tpu.dynamic_rotate %277 by %c3_i32_33 dim 1 : vector<22x128xf32>, i32 -> vector<22x128xf32>
    %279 = vector.extract_strided_slice %278 {offsets = [0, 0], sizes = [16, 128], strides = [1, 1]} : vector<22x128xf32> to vector<16x128xf32>
    %c49 = arith.constant 49 : index
    %280 = memref.load %arg3[%c49] : memref<98xf32, #tpu.memory_space<smem>>
    %281 = vector.broadcast %280 : f32 to vector<16x128xf32>
    %282 = arith.mulf %281, %279 : vector<16x128xf32>
    %283 = arith.addf %261, %282 : vector<16x128xf32>
    %284 = vector.extract_strided_slice %278 {offsets = [1, 0], sizes = [16, 128], strides = [1, 1]} : vector<22x128xf32> to vector<16x128xf32>
    %c56 = arith.constant 56 : index
    %285 = memref.load %arg3[%c56] : memref<98xf32, #tpu.memory_space<smem>>
    %286 = vector.broadcast %285 : f32 to vector<16x128xf32>
    %287 = arith.mulf %286, %284 : vector<16x128xf32>
    %288 = arith.addf %266, %287 : vector<16x128xf32>
    %289 = vector.extract_strided_slice %278 {offsets = [2, 0], sizes = [16, 128], strides = [1, 1]} : vector<22x128xf32> to vector<16x128xf32>
    %c63 = arith.constant 63 : index
    %290 = memref.load %arg3[%c63] : memref<98xf32, #tpu.memory_space<smem>>
    %291 = vector.broadcast %290 : f32 to vector<16x128xf32>
    %292 = arith.mulf %291, %289 : vector<16x128xf32>
    %293 = arith.addf %271, %292 : vector<16x128xf32>
    %294 = vector.extract_strided_slice %278 {offsets = [3, 0], sizes = [16, 128], strides = [1, 1]} : vector<22x128xf32> to vector<16x128xf32>
    %c70 = arith.constant 70 : index
    %295 = memref.load %arg3[%c70] : memref<98xf32, #tpu.memory_space<smem>>
    %296 = vector.broadcast %295 : f32 to vector<16x128xf32>
    %297 = arith.mulf %296, %294 : vector<16x128xf32>
    %298 = arith.addf %276, %297 : vector<16x128xf32>
    %299 = vector.extract_strided_slice %278 {offsets = [4, 0], sizes = [16, 128], strides = [1, 1]} : vector<22x128xf32> to vector<16x128xf32>
    %c77 = arith.constant 77 : index
    %300 = memref.load %arg3[%c77] : memref<98xf32, #tpu.memory_space<smem>>
    %301 = vector.broadcast %300 : f32 to vector<16x128xf32>
    %302 = arith.mulf %301, %299 : vector<16x128xf32>
    %303 = arith.addf %283, %302 : vector<16x128xf32>
    %304 = vector.extract_strided_slice %278 {offsets = [5, 0], sizes = [16, 128], strides = [1, 1]} : vector<22x128xf32> to vector<16x128xf32>
    %c84 = arith.constant 84 : index
    %305 = memref.load %arg3[%c84] : memref<98xf32, #tpu.memory_space<smem>>
    %306 = vector.broadcast %305 : f32 to vector<16x128xf32>
    %307 = arith.mulf %306, %304 : vector<16x128xf32>
    %308 = arith.addf %288, %307 : vector<16x128xf32>
    %309 = vector.extract_strided_slice %278 {offsets = [6, 0], sizes = [16, 128], strides = [1, 1]} : vector<22x128xf32> to vector<16x128xf32>
    %c91 = arith.constant 91 : index
    %310 = memref.load %arg3[%c91] : memref<98xf32, #tpu.memory_space<smem>>
    %311 = vector.broadcast %310 : f32 to vector<16x128xf32>
    %312 = arith.mulf %311, %309 : vector<16x128xf32>
    %313 = arith.addf %293, %312 : vector<16x128xf32>
    %c2_i32_34 = arith.constant 2 : i32
    %314 = tpu.dynamic_rotate %277 by %c2_i32_34 dim 1 : vector<22x128xf32>, i32 -> vector<22x128xf32>
    %315 = vector.extract_strided_slice %314 {offsets = [0, 0], sizes = [16, 128], strides = [1, 1]} : vector<22x128xf32> to vector<16x128xf32>
    %c50 = arith.constant 50 : index
    %316 = memref.load %arg3[%c50] : memref<98xf32, #tpu.memory_space<smem>>
    %317 = vector.broadcast %316 : f32 to vector<16x128xf32>
    %318 = arith.mulf %317, %315 : vector<16x128xf32>
    %319 = arith.addf %298, %318 : vector<16x128xf32>
    %320 = vector.extract_strided_slice %314 {offsets = [1, 0], sizes = [16, 128], strides = [1, 1]} : vector<22x128xf32> to vector<16x128xf32>
    %c57 = arith.constant 57 : index
    %321 = memref.load %arg3[%c57] : memref<98xf32, #tpu.memory_space<smem>>
    %322 = vector.broadcast %321 : f32 to vector<16x128xf32>
    %323 = arith.mulf %322, %320 : vector<16x128xf32>
    %324 = arith.addf %303, %323 : vector<16x128xf32>
    %325 = vector.extract_strided_slice %314 {offsets = [2, 0], sizes = [16, 128], strides = [1, 1]} : vector<22x128xf32> to vector<16x128xf32>
    %c64 = arith.constant 64 : index
    %326 = memref.load %arg3[%c64] : memref<98xf32, #tpu.memory_space<smem>>
    %327 = vector.broadcast %326 : f32 to vector<16x128xf32>
    %328 = arith.mulf %327, %325 : vector<16x128xf32>
    %329 = arith.addf %308, %328 : vector<16x128xf32>
    %330 = vector.extract_strided_slice %314 {offsets = [3, 0], sizes = [16, 128], strides = [1, 1]} : vector<22x128xf32> to vector<16x128xf32>
    %c71 = arith.constant 71 : index
    %331 = memref.load %arg3[%c71] : memref<98xf32, #tpu.memory_space<smem>>
    %332 = vector.broadcast %331 : f32 to vector<16x128xf32>
    %333 = arith.mulf %332, %330 : vector<16x128xf32>
    %334 = arith.addf %313, %333 : vector<16x128xf32>
    %335 = vector.extract_strided_slice %314 {offsets = [4, 0], sizes = [16, 128], strides = [1, 1]} : vector<22x128xf32> to vector<16x128xf32>
    %c78 = arith.constant 78 : index
    %336 = memref.load %arg3[%c78] : memref<98xf32, #tpu.memory_space<smem>>
    %337 = vector.broadcast %336 : f32 to vector<16x128xf32>
    %338 = arith.mulf %337, %335 : vector<16x128xf32>
    %339 = arith.addf %319, %338 : vector<16x128xf32>
    %340 = vector.extract_strided_slice %314 {offsets = [5, 0], sizes = [16, 128], strides = [1, 1]} : vector<22x128xf32> to vector<16x128xf32>
    %c85 = arith.constant 85 : index
    %341 = memref.load %arg3[%c85] : memref<98xf32, #tpu.memory_space<smem>>
    %342 = vector.broadcast %341 : f32 to vector<16x128xf32>
    %343 = arith.mulf %342, %340 : vector<16x128xf32>
    %344 = arith.addf %324, %343 : vector<16x128xf32>
    %345 = vector.extract_strided_slice %314 {offsets = [6, 0], sizes = [16, 128], strides = [1, 1]} : vector<22x128xf32> to vector<16x128xf32>
    %c92 = arith.constant 92 : index
    %346 = memref.load %arg3[%c92] : memref<98xf32, #tpu.memory_space<smem>>
    %347 = vector.broadcast %346 : f32 to vector<16x128xf32>
    %348 = arith.mulf %347, %345 : vector<16x128xf32>
    %349 = arith.addf %329, %348 : vector<16x128xf32>
    %c1_i32_35 = arith.constant 1 : i32
    %350 = tpu.dynamic_rotate %277 by %c1_i32_35 dim 1 : vector<22x128xf32>, i32 -> vector<22x128xf32>
    %351 = vector.extract_strided_slice %350 {offsets = [0, 0], sizes = [16, 128], strides = [1, 1]} : vector<22x128xf32> to vector<16x128xf32>
    %c51 = arith.constant 51 : index
    %352 = memref.load %arg3[%c51] : memref<98xf32, #tpu.memory_space<smem>>
    %353 = vector.broadcast %352 : f32 to vector<16x128xf32>
    %354 = arith.mulf %353, %351 : vector<16x128xf32>
    %355 = arith.addf %334, %354 : vector<16x128xf32>
    %356 = vector.extract_strided_slice %350 {offsets = [1, 0], sizes = [16, 128], strides = [1, 1]} : vector<22x128xf32> to vector<16x128xf32>
    %c58 = arith.constant 58 : index
    %357 = memref.load %arg3[%c58] : memref<98xf32, #tpu.memory_space<smem>>
    %358 = vector.broadcast %357 : f32 to vector<16x128xf32>
    %359 = arith.mulf %358, %356 : vector<16x128xf32>
    %360 = arith.addf %339, %359 : vector<16x128xf32>
    %361 = vector.extract_strided_slice %350 {offsets = [2, 0], sizes = [16, 128], strides = [1, 1]} : vector<22x128xf32> to vector<16x128xf32>
    %c65 = arith.constant 65 : index
    %362 = memref.load %arg3[%c65] : memref<98xf32, #tpu.memory_space<smem>>
    %363 = vector.broadcast %362 : f32 to vector<16x128xf32>
    %364 = arith.mulf %363, %361 : vector<16x128xf32>
    %365 = arith.addf %344, %364 : vector<16x128xf32>
    %366 = vector.extract_strided_slice %350 {offsets = [3, 0], sizes = [16, 128], strides = [1, 1]} : vector<22x128xf32> to vector<16x128xf32>
    %c72 = arith.constant 72 : index
    %367 = memref.load %arg3[%c72] : memref<98xf32, #tpu.memory_space<smem>>
    %368 = vector.broadcast %367 : f32 to vector<16x128xf32>
    %369 = arith.mulf %368, %366 : vector<16x128xf32>
    %370 = arith.addf %349, %369 : vector<16x128xf32>
    %371 = vector.extract_strided_slice %350 {offsets = [4, 0], sizes = [16, 128], strides = [1, 1]} : vector<22x128xf32> to vector<16x128xf32>
    %c79 = arith.constant 79 : index
    %372 = memref.load %arg3[%c79] : memref<98xf32, #tpu.memory_space<smem>>
    %373 = vector.broadcast %372 : f32 to vector<16x128xf32>
    %374 = arith.mulf %373, %371 : vector<16x128xf32>
    %375 = arith.addf %355, %374 : vector<16x128xf32>
    %376 = vector.extract_strided_slice %350 {offsets = [5, 0], sizes = [16, 128], strides = [1, 1]} : vector<22x128xf32> to vector<16x128xf32>
    %c86 = arith.constant 86 : index
    %377 = memref.load %arg3[%c86] : memref<98xf32, #tpu.memory_space<smem>>
    %378 = vector.broadcast %377 : f32 to vector<16x128xf32>
    %379 = arith.mulf %378, %376 : vector<16x128xf32>
    %380 = arith.addf %360, %379 : vector<16x128xf32>
    %381 = vector.extract_strided_slice %350 {offsets = [6, 0], sizes = [16, 128], strides = [1, 1]} : vector<22x128xf32> to vector<16x128xf32>
    %c93 = arith.constant 93 : index
    %382 = memref.load %arg3[%c93] : memref<98xf32, #tpu.memory_space<smem>>
    %383 = vector.broadcast %382 : f32 to vector<16x128xf32>
    %384 = arith.mulf %383, %381 : vector<16x128xf32>
    %385 = arith.addf %365, %384 : vector<16x128xf32>
    %386 = vector.extract_strided_slice %277 {offsets = [0, 0], sizes = [16, 128], strides = [1, 1]} : vector<22x128xf32> to vector<16x128xf32>
    %c52 = arith.constant 52 : index
    %387 = memref.load %arg3[%c52] : memref<98xf32, #tpu.memory_space<smem>>
    %388 = vector.broadcast %387 : f32 to vector<16x128xf32>
    %389 = arith.mulf %388, %386 : vector<16x128xf32>
    %390 = arith.addf %370, %389 : vector<16x128xf32>
    %391 = vector.extract_strided_slice %277 {offsets = [1, 0], sizes = [16, 128], strides = [1, 1]} : vector<22x128xf32> to vector<16x128xf32>
    %c59 = arith.constant 59 : index
    %392 = memref.load %arg3[%c59] : memref<98xf32, #tpu.memory_space<smem>>
    %393 = vector.broadcast %392 : f32 to vector<16x128xf32>
    %394 = arith.mulf %393, %391 : vector<16x128xf32>
    %395 = arith.addf %375, %394 : vector<16x128xf32>
    %396 = vector.extract_strided_slice %277 {offsets = [2, 0], sizes = [16, 128], strides = [1, 1]} : vector<22x128xf32> to vector<16x128xf32>
    %c66 = arith.constant 66 : index
    %397 = memref.load %arg3[%c66] : memref<98xf32, #tpu.memory_space<smem>>
    %398 = vector.broadcast %397 : f32 to vector<16x128xf32>
    %399 = arith.mulf %398, %396 : vector<16x128xf32>
    %400 = arith.addf %380, %399 : vector<16x128xf32>
    %401 = vector.extract_strided_slice %277 {offsets = [3, 0], sizes = [16, 128], strides = [1, 1]} : vector<22x128xf32> to vector<16x128xf32>
    %c73 = arith.constant 73 : index
    %402 = memref.load %arg3[%c73] : memref<98xf32, #tpu.memory_space<smem>>
    %403 = vector.broadcast %402 : f32 to vector<16x128xf32>
    %404 = arith.mulf %403, %401 : vector<16x128xf32>
    %405 = arith.addf %385, %404 : vector<16x128xf32>
    %406 = vector.extract_strided_slice %277 {offsets = [4, 0], sizes = [16, 128], strides = [1, 1]} : vector<22x128xf32> to vector<16x128xf32>
    %c80 = arith.constant 80 : index
    %407 = memref.load %arg3[%c80] : memref<98xf32, #tpu.memory_space<smem>>
    %408 = vector.broadcast %407 : f32 to vector<16x128xf32>
    %409 = arith.mulf %408, %406 : vector<16x128xf32>
    %410 = arith.addf %390, %409 : vector<16x128xf32>
    %411 = vector.extract_strided_slice %277 {offsets = [5, 0], sizes = [16, 128], strides = [1, 1]} : vector<22x128xf32> to vector<16x128xf32>
    %c87 = arith.constant 87 : index
    %412 = memref.load %arg3[%c87] : memref<98xf32, #tpu.memory_space<smem>>
    %413 = vector.broadcast %412 : f32 to vector<16x128xf32>
    %414 = arith.mulf %413, %411 : vector<16x128xf32>
    %415 = arith.addf %395, %414 : vector<16x128xf32>
    %416 = vector.extract_strided_slice %277 {offsets = [6, 0], sizes = [16, 128], strides = [1, 1]} : vector<22x128xf32> to vector<16x128xf32>
    %c94 = arith.constant 94 : index
    %417 = memref.load %arg3[%c94] : memref<98xf32, #tpu.memory_space<smem>>
    %418 = vector.broadcast %417 : f32 to vector<16x128xf32>
    %419 = arith.mulf %418, %416 : vector<16x128xf32>
    %420 = arith.addf %400, %419 : vector<16x128xf32>
    %c127_i32_36 = arith.constant 127 : i32
    %421 = tpu.dynamic_rotate %277 by %c127_i32_36 dim 1 : vector<22x128xf32>, i32 -> vector<22x128xf32>
    %422 = vector.extract_strided_slice %421 {offsets = [0, 0], sizes = [16, 128], strides = [1, 1]} : vector<22x128xf32> to vector<16x128xf32>
    %c53 = arith.constant 53 : index
    %423 = memref.load %arg3[%c53] : memref<98xf32, #tpu.memory_space<smem>>
    %424 = vector.broadcast %423 : f32 to vector<16x128xf32>
    %425 = arith.mulf %424, %422 : vector<16x128xf32>
    %426 = arith.addf %405, %425 : vector<16x128xf32>
    %427 = vector.extract_strided_slice %421 {offsets = [1, 0], sizes = [16, 128], strides = [1, 1]} : vector<22x128xf32> to vector<16x128xf32>
    %c60 = arith.constant 60 : index
    %428 = memref.load %arg3[%c60] : memref<98xf32, #tpu.memory_space<smem>>
    %429 = vector.broadcast %428 : f32 to vector<16x128xf32>
    %430 = arith.mulf %429, %427 : vector<16x128xf32>
    %431 = arith.addf %410, %430 : vector<16x128xf32>
    %432 = vector.extract_strided_slice %421 {offsets = [2, 0], sizes = [16, 128], strides = [1, 1]} : vector<22x128xf32> to vector<16x128xf32>
    %c67 = arith.constant 67 : index
    %433 = memref.load %arg3[%c67] : memref<98xf32, #tpu.memory_space<smem>>
    %434 = vector.broadcast %433 : f32 to vector<16x128xf32>
    %435 = arith.mulf %434, %432 : vector<16x128xf32>
    %436 = arith.addf %415, %435 : vector<16x128xf32>
    %437 = vector.extract_strided_slice %421 {offsets = [3, 0], sizes = [16, 128], strides = [1, 1]} : vector<22x128xf32> to vector<16x128xf32>
    %c74 = arith.constant 74 : index
    %438 = memref.load %arg3[%c74] : memref<98xf32, #tpu.memory_space<smem>>
    %439 = vector.broadcast %438 : f32 to vector<16x128xf32>
    %440 = arith.mulf %439, %437 : vector<16x128xf32>
    %441 = arith.addf %420, %440 : vector<16x128xf32>
    %442 = vector.extract_strided_slice %421 {offsets = [4, 0], sizes = [16, 128], strides = [1, 1]} : vector<22x128xf32> to vector<16x128xf32>
    %c81 = arith.constant 81 : index
    %443 = memref.load %arg3[%c81] : memref<98xf32, #tpu.memory_space<smem>>
    %444 = vector.broadcast %443 : f32 to vector<16x128xf32>
    %445 = arith.mulf %444, %442 : vector<16x128xf32>
    %446 = arith.addf %426, %445 : vector<16x128xf32>
    %447 = vector.extract_strided_slice %421 {offsets = [5, 0], sizes = [16, 128], strides = [1, 1]} : vector<22x128xf32> to vector<16x128xf32>
    %c88 = arith.constant 88 : index
    %448 = memref.load %arg3[%c88] : memref<98xf32, #tpu.memory_space<smem>>
    %449 = vector.broadcast %448 : f32 to vector<16x128xf32>
    %450 = arith.mulf %449, %447 : vector<16x128xf32>
    %451 = arith.addf %431, %450 : vector<16x128xf32>
    %452 = vector.extract_strided_slice %421 {offsets = [6, 0], sizes = [16, 128], strides = [1, 1]} : vector<22x128xf32> to vector<16x128xf32>
    %c95 = arith.constant 95 : index
    %453 = memref.load %arg3[%c95] : memref<98xf32, #tpu.memory_space<smem>>
    %454 = vector.broadcast %453 : f32 to vector<16x128xf32>
    %455 = arith.mulf %454, %452 : vector<16x128xf32>
    %456 = arith.addf %436, %455 : vector<16x128xf32>
    %c126_i32_37 = arith.constant 126 : i32
    %457 = tpu.dynamic_rotate %277 by %c126_i32_37 dim 1 : vector<22x128xf32>, i32 -> vector<22x128xf32>
    %458 = vector.extract_strided_slice %457 {offsets = [0, 0], sizes = [16, 128], strides = [1, 1]} : vector<22x128xf32> to vector<16x128xf32>
    %c54 = arith.constant 54 : index
    %459 = memref.load %arg3[%c54] : memref<98xf32, #tpu.memory_space<smem>>
    %460 = vector.broadcast %459 : f32 to vector<16x128xf32>
    %461 = arith.mulf %460, %458 : vector<16x128xf32>
    %462 = arith.addf %441, %461 : vector<16x128xf32>
    %463 = vector.extract_strided_slice %457 {offsets = [1, 0], sizes = [16, 128], strides = [1, 1]} : vector<22x128xf32> to vector<16x128xf32>
    %c61 = arith.constant 61 : index
    %464 = memref.load %arg3[%c61] : memref<98xf32, #tpu.memory_space<smem>>
    %465 = vector.broadcast %464 : f32 to vector<16x128xf32>
    %466 = arith.mulf %465, %463 : vector<16x128xf32>
    %467 = arith.addf %446, %466 : vector<16x128xf32>
    %468 = vector.extract_strided_slice %457 {offsets = [2, 0], sizes = [16, 128], strides = [1, 1]} : vector<22x128xf32> to vector<16x128xf32>
    %c68 = arith.constant 68 : index
    %469 = memref.load %arg3[%c68] : memref<98xf32, #tpu.memory_space<smem>>
    %470 = vector.broadcast %469 : f32 to vector<16x128xf32>
    %471 = arith.mulf %470, %468 : vector<16x128xf32>
    %472 = arith.addf %451, %471 : vector<16x128xf32>
    %473 = vector.extract_strided_slice %457 {offsets = [3, 0], sizes = [16, 128], strides = [1, 1]} : vector<22x128xf32> to vector<16x128xf32>
    %c75 = arith.constant 75 : index
    %474 = memref.load %arg3[%c75] : memref<98xf32, #tpu.memory_space<smem>>
    %475 = vector.broadcast %474 : f32 to vector<16x128xf32>
    %476 = arith.mulf %475, %473 : vector<16x128xf32>
    %477 = arith.addf %456, %476 : vector<16x128xf32>
    %478 = vector.extract_strided_slice %457 {offsets = [4, 0], sizes = [16, 128], strides = [1, 1]} : vector<22x128xf32> to vector<16x128xf32>
    %c82 = arith.constant 82 : index
    %479 = memref.load %arg3[%c82] : memref<98xf32, #tpu.memory_space<smem>>
    %480 = vector.broadcast %479 : f32 to vector<16x128xf32>
    %481 = arith.mulf %480, %478 : vector<16x128xf32>
    %482 = arith.addf %462, %481 : vector<16x128xf32>
    %483 = vector.extract_strided_slice %457 {offsets = [5, 0], sizes = [16, 128], strides = [1, 1]} : vector<22x128xf32> to vector<16x128xf32>
    %c89 = arith.constant 89 : index
    %484 = memref.load %arg3[%c89] : memref<98xf32, #tpu.memory_space<smem>>
    %485 = vector.broadcast %484 : f32 to vector<16x128xf32>
    %486 = arith.mulf %485, %483 : vector<16x128xf32>
    %487 = arith.addf %467, %486 : vector<16x128xf32>
    %488 = vector.extract_strided_slice %457 {offsets = [6, 0], sizes = [16, 128], strides = [1, 1]} : vector<22x128xf32> to vector<16x128xf32>
    %c96 = arith.constant 96 : index
    %489 = memref.load %arg3[%c96] : memref<98xf32, #tpu.memory_space<smem>>
    %490 = vector.broadcast %489 : f32 to vector<16x128xf32>
    %491 = arith.mulf %490, %488 : vector<16x128xf32>
    %492 = arith.addf %472, %491 : vector<16x128xf32>
    %c125_i32_38 = arith.constant 125 : i32
    %493 = tpu.dynamic_rotate %277 by %c125_i32_38 dim 1 : vector<22x128xf32>, i32 -> vector<22x128xf32>
    %494 = vector.extract_strided_slice %493 {offsets = [0, 0], sizes = [16, 128], strides = [1, 1]} : vector<22x128xf32> to vector<16x128xf32>
    %c55 = arith.constant 55 : index
    %495 = memref.load %arg3[%c55] : memref<98xf32, #tpu.memory_space<smem>>
    %496 = vector.broadcast %495 : f32 to vector<16x128xf32>
    %497 = arith.mulf %496, %494 : vector<16x128xf32>
    %498 = arith.addf %477, %497 : vector<16x128xf32>
    %499 = vector.extract_strided_slice %493 {offsets = [1, 0], sizes = [16, 128], strides = [1, 1]} : vector<22x128xf32> to vector<16x128xf32>
    %c62 = arith.constant 62 : index
    %500 = memref.load %arg3[%c62] : memref<98xf32, #tpu.memory_space<smem>>
    %501 = vector.broadcast %500 : f32 to vector<16x128xf32>
    %502 = arith.mulf %501, %499 : vector<16x128xf32>
    %503 = arith.addf %482, %502 : vector<16x128xf32>
    %504 = vector.extract_strided_slice %493 {offsets = [2, 0], sizes = [16, 128], strides = [1, 1]} : vector<22x128xf32> to vector<16x128xf32>
    %c69 = arith.constant 69 : index
    %505 = memref.load %arg3[%c69] : memref<98xf32, #tpu.memory_space<smem>>
    %506 = vector.broadcast %505 : f32 to vector<16x128xf32>
    %507 = arith.mulf %506, %504 : vector<16x128xf32>
    %508 = arith.addf %487, %507 : vector<16x128xf32>
    %509 = vector.extract_strided_slice %493 {offsets = [3, 0], sizes = [16, 128], strides = [1, 1]} : vector<22x128xf32> to vector<16x128xf32>
    %c76 = arith.constant 76 : index
    %510 = memref.load %arg3[%c76] : memref<98xf32, #tpu.memory_space<smem>>
    %511 = vector.broadcast %510 : f32 to vector<16x128xf32>
    %512 = arith.mulf %511, %509 : vector<16x128xf32>
    %513 = arith.addf %492, %512 : vector<16x128xf32>
    %514 = vector.extract_strided_slice %493 {offsets = [4, 0], sizes = [16, 128], strides = [1, 1]} : vector<22x128xf32> to vector<16x128xf32>
    %c83 = arith.constant 83 : index
    %515 = memref.load %arg3[%c83] : memref<98xf32, #tpu.memory_space<smem>>
    %516 = vector.broadcast %515 : f32 to vector<16x128xf32>
    %517 = arith.mulf %516, %514 : vector<16x128xf32>
    %518 = arith.addf %498, %517 : vector<16x128xf32>
    %519 = vector.extract_strided_slice %493 {offsets = [5, 0], sizes = [16, 128], strides = [1, 1]} : vector<22x128xf32> to vector<16x128xf32>
    %c90 = arith.constant 90 : index
    %520 = memref.load %arg3[%c90] : memref<98xf32, #tpu.memory_space<smem>>
    %521 = vector.broadcast %520 : f32 to vector<16x128xf32>
    %522 = arith.mulf %521, %519 : vector<16x128xf32>
    %523 = arith.addf %503, %522 : vector<16x128xf32>
    %524 = vector.extract_strided_slice %493 {offsets = [6, 0], sizes = [16, 128], strides = [1, 1]} : vector<22x128xf32> to vector<16x128xf32>
    %c97 = arith.constant 97 : index
    %525 = memref.load %arg3[%c97] : memref<98xf32, #tpu.memory_space<smem>>
    %526 = vector.broadcast %525 : f32 to vector<16x128xf32>
    %527 = arith.mulf %526, %524 : vector<16x128xf32>
    %528 = arith.addf %508, %527 : vector<16x128xf32>
    %529 = arith.addf %523, %528 : vector<16x128xf32>
    %530 = arith.addf %513, %518 : vector<16x128xf32>
    %531 = arith.addf %529, %530 : vector<16x128xf32>
    %532 = arith.negf %531 : vector<16x128xf32>
    %533 = math.exp %532 : vector<16x128xf32>
    %cst_39 = arith.constant 1.000000e+00 : f32
    %534 = vector.broadcast %cst_39 : f32 to vector<16x128xf32>
    %535 = arith.addf %534, %533 : vector<16x128xf32>
    %536 = arith.divf %534, %535 : vector<16x128xf32>
    %c0_40 = arith.constant 0 : index
    %c0_41 = arith.constant 0 : index
    %c0_42 = arith.constant 0 : index
    %c0_43 = arith.constant 0 : index
    %537 = vector.load %arg5[%c0_40, %c0_41, %c0_42, %c0_43] : memref<1x1x16x128xf32, #tpu.memory_space<vmem>>, vector<1x1x16x128xf32>
    %538 = vector.shape_cast %537 : vector<1x1x16x128xf32> to vector<16x128xf32>
    %539 = vector.shape_cast %536 : vector<16x128xf32> to vector<1x1x16x128xf32>
    tpu.vector_store %arg5[%c0_40, %c0_41, %c0_42, %c0_43], %539 {strides = array<i32>} : memref<1x1x16x128xf32, #tpu.memory_space<vmem>>, vector<1x1x16x128xf32>,
    return
  }
  func.func @transform_0(%arg0: i32, %arg1: i32) -> (i32, i32, i32, i32) {
    %c0_i32 = arith.constant 0 : i32
    %c0_i32_0 = arith.constant 0 : i32
    %c0_i32_1 = arith.constant 0 : i32
    return %arg0, %arg1, %c0_i32, %c0_i32_0 : i32, i32, i32, i32
  }
  func.func @transform_1(%arg0: i32, %arg1: i32) -> i32 {
    %c0_i32 = arith.constant 0 : i32
    %c0_i32_0 = arith.constant 0 : i32
    return %c0_i32 : i32
  }
  func.func @transform_2(%arg0: i32, %arg1: i32) -> i32 {
    %c0_i32 = arith.constant 0 : i32
    %c0_i32_0 = arith.constant 0 : i32
    return %c0_i32 : i32
  }
  func.func @transform_3(%arg0: i32, %arg1: i32) -> (i32, i32, i32, i32) {
    %c0_i32 = arith.constant 0 : i32
    %c0_i32_0 = arith.constant 0 : i32
    %c0_i32_1 = arith.constant 0 : i32
    %c0_i32_2 = arith.constant 0 : i32
    return %arg0, %c0_i32, %c0_i32_0, %c0_i32_1 : i32, i32, i32, i32
  }
}

</mosaic_0001>

<llo_original>
// kernel: tpu_custom_call.1
$region0: #{tpu_custom_call.1}
  #allocation0 [shape = 'u32[]', space=smem, size = 0x4, offset = 0x4, fixed_abs, tag = 'smem constant byte address 0x4 - core index']
  #allocation1 [shape = 'u32[144,128]{1,0:T(1,128)}', space=vmem, size = 0x12000, scoped, tag = 'internal scratch']
  #allocation2 [shape = 'f32[32,128]{1,0:T(8,128)}', space=vmem, size = 0x4000, scoped, tag = 'scratch operand']
  #allocation3 [shape = 'f32[32,128]{1,0:T(8,128)}', space=vmem, size = 0x4000, scoped, tag = 'scratch operand']
  #allocation4 [shape = 'f32[1]{0:T(128)S(6)}', space=smem, size = 0x200, scoped, tag = 'scoped memory for tpu_custom_call.1']
  %s0 = inlined_call_operand.hbm [shape: f32[2,4,16,16], index: 0, kind: input, shape index: {}]
  %s1 = inlined_call_operand.vmem [shape: f32[98], index: 1, kind: input, shape index: {}]
  %s2 = inlined_call_operand.<no memory space> [shape: f32[1], index: 2, kind: input, shape index: {}]
  %s3 = inlined_call_operand.hbm [shape: f32[2,1,16,128], index: 3, kind: output, shape index: {}]
  %s4 = sld [smem:[#allocation0]]
  $region53: #{tpu_custom_call.1} parent=0
    _
  %s6 = ssub.s32 1, %s4
  %s7 = scalar_select 0, %s6, %s4
  %8 = sst [smem:[#allocation4]] %s2
  $region1: #{tpu_custom_call.1} parent=0
    #allocation5 [shape = 'u8[65536]{0}', space=vmem, size = 0x10000, scoped, tag = 'input window, operand 0']
    #allocation6 [shape = 's32[2]{0}', space=sflag, size = 0x8, scoped, tag = 'scoped memory for tpu_custom_call.1']
    #allocation7 [shape = 's32[2]{0}', space=sflag, size = 0x8, scoped, tag = 'scoped memory for tpu_custom_call.1']
    #allocation8 [shape = 's32[2]{0}', space=sflag, size = 0x8, scoped, tag = 'scoped memory for tpu_custom_call.1']
    #allocation9 [shape = 'u8[512]{0}', space=smem, size = 0x200, scoped, tag = 'input window, operand 1, single buffered']
    #allocation10 [shape = 'u8[16384]{0}', space=vmem, size = 0x4000, scoped, tag = 'output window, operand 0']
    %9 = vsyncpa [#allocation6], 0
    %s10 = scalar_lea.sflag [#allocation6], 1
    %11 = vsyncpa %s10, 0
    %12 = vsyncpa [#allocation8], 0
    %13 = vsyncpa [#allocation7], 0
    %s14 = scalar_lea.sflag [#allocation7], 1
    %15 = vsyncpa %s14, 0
    loop: start=0, step=1, limit=4
    $region2: #{tpu_custom_call.1} parent=1 // loop_pre_header
      _
    $region3: #{tpu_custom_call.1} parent=1 // loop_header
      %s17 = sphi 0, %s21
      %p18 = scmp.ge.s32.totalorder %s17, 4
      %s24 = sphi 0, %s36
      %s25 = sphi 0, %s32
      %s26 = sphi 0, %s24
      %s27 = sphi 0, %s25
      %s28 = sphi 0, %s26
      %s29 = sphi 0, %s27
      %s41 = sphi 0, %s43
      %s44 = sphi 0, %s41
      %s45 = sphi 0, %s44
      %s61 = sphi 0, %s45
      %s65 = sphi 0, %s65
      %s67 = sphi 0, %s65
      %s68 = sphi 0, %s67
      %s82 = sphi 0, %s68
      %s86 = sphi 0, %s86
      %s88 = sphi 0, %s86
      %s89 = sphi 0, %s88
      %s103 = sphi 0, %s89
      %s109 = sphi 0, %s111
      %s112 = sphi 0, %s109
      %s113 = sphi 0, %s112
      %s129 = sphi 0, %s113
    $region4: #{tpu_custom_call.1} parent=1 // loop_header_branch
      %20 = sbr.rel (%p18) target = $region8
    $region5: #{tpu_custom_call.1} parent=1 // loop_body
      %s22 = ssub.s32 %s17, 1
      %s23 = ssub.s32 %s17, 2
      %s30 = sadd.s32 1, %s25
      %p31 = scmp.ge.s32.totalorder %s30, 1
      %s32 = scalar_select %p31, 0, %s30
      %s33 = sadd.s32 1, %s24
      %s34 = scalar_select %p31, %s33, %s24
      %p35 = scmp.ge.s32.totalorder %s34, 2
      %s36 = scalar_select %p35, 0, %s34
      %s37 = ssub.s32 %s24, %s36
      %s38 = ssub.s32 %s25, %s32
      %s39 = sor.u32 %s37, %s38
      %p40 = scmp.eq.s32.totalorder %s39, 0
      %s42 = sadd.s32 %s41, 1
      %s43 = scalar_select %p40, %s41, %s42
      %p46 = pneg %p40
      %p47 = scmp.eq.s32.totalorder %s17, 1
      %p48 = por %p46, %p47
      %p49 = scmp.ne.s32.totalorder %s41, %s44
      %p50 = scmp.eq.s32.totalorder %s17, 0
      %p51 = por %p49, %p50
      %p52 = scmp.ne.s32.totalorder %s41, %s44
      %p53 = scmp.eq.s32.totalorder %s22, 1
      %p54 = por %p52, %p53
      %p55 = scmp.ne.s32.totalorder %s44, %s45
      %p56 = scmp.eq.s32.totalorder %s22, 0
      %p57 = por %p55, %p56
      %p58 = scmp.ne.s32.totalorder %s44, %s45
      %p59 = scmp.eq.s32.totalorder %s23, 1
      %p60 = por %p58, %p59
      %p62 = scmp.ne.s32.totalorder %s45, %s61
      %p63 = scmp.eq.s32.totalorder %s23, 0
      %p64 = por %p62, %p63
      %s66 = sadd.s32 %s65, 1
      %p69 = scmp.eq.s32.totalorder %s17, 1
      %p70 = scmp.ne.s32.totalorder %s65, %s67
      %p71 = scmp.eq.s32.totalorder %s17, 0
      %p72 = por %p70, %p71
      %p73 = scmp.ne.s32.totalorder %s65, %s67
      %p74 = scmp.eq.s32.totalorder %s22, 1
      %p75 = por %p73, %p74
      %p76 = scmp.ne.s32.totalorder %s67, %s68
      %p77 = scmp.eq.s32.totalorder %s22, 0
      %p78 = por %p76, %p77
      %p79 = scmp.ne.s32.totalorder %s67, %s68
      %p80 = scmp.eq.s32.totalorder %s23, 1
      %p81 = por %p79, %p80
      %p83 = scmp.ne.s32.totalorder %s68, %s82
      %p84 = scmp.eq.s32.totalorder %s23, 0
      %p85 = por %p83, %p84
      %s87 = sadd.s32 %s86, 1
      %p90 = scmp.eq.s32.totalorder %s17, 1
      %p91 = scmp.ne.s32.totalorder %s86, %s88
      %p92 = scmp.eq.s32.totalorder %s17, 0
      %p93 = por %p91, %p92
      %p94 = scmp.ne.s32.totalorder %s86, %s88
      %p95 = scmp.eq.s32.totalorder %s22, 1
      %p96 = por %p94, %p95
      %p97 = scmp.ne.s32.totalorder %s88, %s89
      %p98 = scmp.eq.s32.totalorder %s22, 0
      %p99 = por %p97, %p98
      %p100 = scmp.ne.s32.totalorder %s88, %s89
      %p101 = scmp.eq.s32.totalorder %s23, 1
      %p102 = por %p100, %p101
      %p104 = scmp.ne.s32.totalorder %s89, %s103
      %p105 = scmp.eq.s32.totalorder %s23, 0
      %p106 = por %p104, %p105
      %s107 = ssub.s32 %s24, %s36
      %p108 = scmp.eq.s32.totalorder %s107, 0
      %s110 = sadd.s32 %s109, 1
      %s111 = scalar_select %p108, %s109, %s110
      %p114 = pneg %p108
      %p115 = scmp.eq.s32.totalorder %s17, 1
      %p116 = por %p114, %p115
      %p117 = scmp.ne.s32.totalorder %s109, %s112
      %p118 = scmp.eq.s32.totalorder %s17, 0
      %p119 = por %p117, %p118
      %p120 = scmp.ne.s32.totalorder %s109, %s112
      %p121 = scmp.eq.s32.totalorder %s22, 1
      %p122 = por %p120, %p121
      %p123 = scmp.ne.s32.totalorder %s112, %s113
      %p124 = scmp.eq.s32.totalorder %s22, 0
      %p125 = por %p123, %p124
      %p126 = scmp.ne.s32.totalorder %s112, %s113
      %p127 = scmp.eq.s32.totalorder %s23, 1
      %p128 = por %p126, %p127
      %p130 = scmp.ne.s32.totalorder %s113, %s129
      %p131 = scmp.eq.s32.totalorder %s23, 0
      %p132 = por %p130, %p131
      %p133 = scmp.le.s32.totalorder 1, %s17
      %p134 = scmp.lt.s32.totalorder %s17, 3
      %p135 = pnand %p133, %p134
      %p136 = pneg %p135
      // Predicated region
      $region9: #{tpu_custom_call.1} parent=5 // pred_check
        _
      $region10: #{tpu_custom_call.1} parent=5 // pred_check_branch
        %138 = sbr.rel (%p135) target = $region12
      $region11: #{tpu_custom_call.1} parent=5 // pred_region
        %s139 = ssub.s32 %s17, 1
        // Predicated region
        $region13: #{tpu_custom_call.1} parent=11 // pred_check
          %p140 = pneg %p78
        $region14: #{tpu_custom_call.1} parent=11 // pred_check_branch
          %142 = sbr.rel (%p140) target = $region16
        $region15: #{tpu_custom_call.1} parent=11 // pred_region
          %s144 = ssub.s32 16, 16
          %145 = vsyncadd [#allocation8], %s144
          %s147 = sshll.u32 %s1, 4
          %s148 = int_to_ptr.vmem [resolvable:$true] %s147
          %150 = dma.vmem_to_smem %s148, 16, [#allocation9], [#allocation8]
        $region16: #{tpu_custom_call.1} parent=11 // pred_fallthru
          _
        // Predicated region
        $region17: #{tpu_custom_call.1} parent=11 // pred_check
          %p151 = pneg %p99
        $region18: #{tpu_custom_call.1} parent=11 // pred_check_branch
          %153 = sbr.rel (%p151) target = $region20
        $region19: #{tpu_custom_call.1} parent=11 // pred_region
          _
        $region20: #{tpu_custom_call.1} parent=11 // pred_fallthru
          _
      $region12: #{tpu_custom_call.1} parent=5 // pred_fallthru
        _
      %p154 = scmp.lt.s32.totalorder %s17, 2
      // Predicated region
      $region21: #{tpu_custom_call.1} parent=5 // pred_check
        %p155 = pneg %p154
      $region22: #{tpu_custom_call.1} parent=5 // pred_check_branch
        %157 = sbr.rel (%p155) target = $region24
      $region23: #{tpu_custom_call.1} parent=5 // pred_region
        // Predicated region
        $region25: #{tpu_custom_call.1} parent=23 // pred_check
          %p158 = pneg %p51
        $region26: #{tpu_custom_call.1} parent=23 // pred_check_branch
          %160 = sbr.rel (%p158) target = $region28
        $region27: #{tpu_custom_call.1} parent=23 // pred_region
          %s161 = sand.u32 %s41, 1
          %s162 = scalar_lea.sflag [#allocation6], %s161
          %s163 = sand.u32 %s41, 1
          %s164 = smul.addr %s163, 64
          %s165 = scalar_lea.vmem [#allocation5], %s164
          %s166 = smul.u32 4, %s25
          %s168 = ssub.s32 1024, 1024
          %169 = vsyncadd %s162, %s168
          %s170 = smul.addr %s166, 2
          %s171 = smul.addr %s24, 8
          %s172 = sadd.s32 %s170, %s171
          %s173 = smul.addr %s172, 128
          %s174 = scalar_lea.hbm %s0, %s173
          %s175 = sshll.u32 %s165, 4
          %s176 = int_to_ptr.vmem [resolvable:$true] %s175
          %181 = dma.hbm_to_vmem [thread:$0]  %s174, 1024, %s176, %s162, 128, 128, 8
        $region28: #{tpu_custom_call.1} parent=23 // pred_fallthru
          _
      $region24: #{tpu_custom_call.1} parent=5 // pred_fallthru
        _
      %p182 = scmp.le.s32.totalorder 1, %s17
      %p183 = scmp.lt.s32.totalorder %s17, 3
      %p184 = pnand %p182, %p183
      %p185 = pneg %p184
      // Predicated region
      $region29: #{tpu_custom_call.1} parent=5 // pred_check
        _
      $region30: #{tpu_custom_call.1} parent=5 // pred_check_branch
        %187 = sbr.rel (%p184) target = $region32
      $region31: #{tpu_custom_call.1} parent=5 // pred_region
        %s188 = ssub.s32 %s17, 1
        %s189 = sand.u32 %s44, 1
        %s190 = scalar_lea.sflag [#allocation6], %s189
        %s191 = sand.u32 %s44, 1
        %s192 = smul.addr %s191, 64
        %s193 = scalar_lea.vmem [#allocation5], %s192
        // Predicated region
        $region33: #{tpu_custom_call.1} parent=31 // pred_check
          %p194 = pneg %p57
        $region34: #{tpu_custom_call.1} parent=31 // pred_check_branch
          %196 = sbr.rel (%p194) target = $region36
        $region35: #{tpu_custom_call.1} parent=31 // pred_region
          %197 = dma.done %s190, 1024
        $region36: #{tpu_custom_call.1} parent=31 // pred_fallthru
          _
        // Predicated region
        $region37: #{tpu_custom_call.1} parent=31 // pred_check
          %p198 = pneg %p78
        $region38: #{tpu_custom_call.1} parent=31 // pred_check_branch
          %200 = sbr.rel (%p198) target = $region40
        $region39: #{tpu_custom_call.1} parent=31 // pred_region
          %201 = dma.done [#allocation8], 16
        $region40: #{tpu_custom_call.1} parent=31 // pred_fallthru
          _
        %202 = sfence
        %s203 = sand.u32 %s44, 1
        %s204 = scalar_lea.sflag [#allocation6], %s203
        %s205 = sand.u32 %s44, 1
        %s206 = smul.addr %s205, 64
        %s207 = scalar_lea.vmem [#allocation5], %s206
        %p208 = pneg %p57
        %p209 = pneg %p54
        %p210 = pneg %p78
        %p211 = pneg %p75
        %p212 = pneg %p99
        %p213 = pneg %p96
        %p214 = pneg %p125
        %p215 = pneg %p122
        %s216 = sand.u32 %s112, 1
        %s217 = scalar_lea.sflag [#allocation7], %s216
        %s218 = sand.u32 %s112, 1
        %s219 = smul.addr %s218, 16
        %s220 = scalar_lea.vmem [#allocation10], %s219
        %s221 = smul.u32 4, %s27
        %v222 = vld [vmem:[%s193] sm:$0xff]
        %v223 = vld [vmem:[%s193 + $0x8] sm:$0xff]
        %s224 = scalar_lea.vmem %s193, 16 [#allocation5]
        %v225 = vld [vmem:[%s224] sm:$0xff]
        %v226 = vld [vmem:[%s224 + $0x8] sm:$0xff]
        %s227 = scalar_lea.vmem %s193, 32 [#allocation5]
        %v228 = vld [vmem:[%s227] sm:$0xff]
        %v229 = vld [vmem:[%s227 + $0x8] sm:$0xff]
        %v230 = vadd.f32 %v222, %v228
        %v231 = vadd.f32 %v223, %v229
        %v232 = vmax.f32 %v222, %v228
        %v233 = vmax.f32 %v223, %v229
        %s234 = scalar_lea.vmem %s193, 48 [#allocation5]
        %v235 = vld [vmem:[%s234] sm:$0xff]
        %v236 = vld [vmem:[%s234 + $0x8] sm:$0xff]
        %v237 = vadd.f32 %v225, %v235
        %v238 = vadd.f32 %v226, %v236
        %v239 = vmax.f32 %v225, %v235
        %v240 = vmax.f32 %v226, %v236
        %v241 = vadd.f32 %v230, %v237
        %v242 = vadd.f32 %v231, %v238
        %v243 = vmax.f32 %v232, %v239
        %v244 = vmax.f32 %v233, %v240
        %245 = vst [vmem:[#allocation2] sm:$0xff] 0.0
        %246 = vst [vmem:[#allocation2 + $0x8] sm:$0xff] 0.0
        %247 = vst [vmem:[#allocation2 + $0x10] sm:$0xff] 0.0
        %248 = vst [vmem:[#allocation2 + $0x18] sm:$0xff] 0.0
        %249 = vst [vmem:[#allocation3] sm:$0xff] 0.0
        %250 = vst [vmem:[#allocation3 + $0x8] sm:$0xff] 0.0
        %251 = vst [vmem:[#allocation3 + $0x10] sm:$0xff] 0.0
        %252 = vst [vmem:[#allocation3 + $0x18] sm:$0xff] 0.0
        %vm253 = vcmask 130048
        %254 = vst.msk [vmem:[#allocation2 + $0x8] sm:$0xff] %vm253, %v241
        %255 = vst.msk [vmem:[#allocation2 + $0x10] sm:$0xff] %vm253, %v242
        %256 = vst.msk [vmem:[#allocation3 + $0x8] sm:$0xff] %vm253, %v243
        %257 = vst.msk [vmem:[#allocation3 + $0x10] sm:$0xff] %vm253, %v244
        %s258 = sld [smem:[#allocation4]]
        %v259 = vstv %s258
        %v260 = vld [vmem:[#allocation2 + $0x5] sm:$0xff]
        %v261 = vld [vmem:[#allocation2 + $0xd] sm:$0xff]
        %v262 = vld [vmem:[#allocation2 + $0x15] sm:$0x3f]
        %263 = vrot.lane.b32.xlu0 %v260, 3
        %v264 = vpop.permute.xlu0 %263
        %265 = vrot.lane.b32.xlu0 %v261, 3
        %v266 = vpop.permute.xlu0 %265
        %267 = vrot.lane.b32.xlu0 %v262, 3
        %v268 = vpop.permute.xlu0 %267
        %s269 = sld [smem:[#allocation9]]
        %v270 = vstv %s269
        %v271 = vmul.f32 %v270, %v264
        %v272 = vmul.f32 %v270, %v266
        %v273 = vadd.f32 %v259, %v271
        %v274 = vadd.f32 %v259, %v272
        %s275 = sld [smem:[#allocation9 + $0x7]]
        %v276 = vstv %s275
        %v277 = vmul.f32 %v276, %v264
        %v278 = vmul.f32 %v276, %v266
        %v279 = vmul.f32 %v276, %v268
        %v280 = vadd.f32 %v277, 0.0
        %v281 = vadd.f32 %v278, 0.0
        %v282 = vadd.f32 %v279, 0.0
        %s283 = sld [smem:[#allocation9 + $0xe]]
        %v284 = vstv %s283
        %v285 = vmul.f32 %v284, %v264
        %v286 = vmul.f32 %v284, %v266
        %v287 = vmul.f32 %v284, %v268
        %v288 = vadd.f32 %v285, 0.0
        %v289 = vadd.f32 %v286, 0.0
        %v290 = vadd.f32 %v287, 0.0
        %s291 = sld [smem:[#allocation9 + $0x15]]
        %v292 = vstv %s291
        %v293 = vmul.f32 %v292, %v264
        %v294 = vmul.f32 %v292, %v266
        %v295 = vmul.f32 %v292, %v268
        %v296 = vadd.f32 %v293, 0.0
        %v297 = vadd.f32 %v294, 0.0
        %v298 = vadd.f32 %v295, 0.0
        %s299 = sld [smem:[#allocation9 + $0x1c]]
        %v300 = vstv %s299
        %v301 = vmul.f32 %v300, %v264
        %v302 = vmul.f32 %v300, %v266
        %v303 = vmul.f32 %v300, %v268
        %vm307 = vcmask 1043456
        %v308 = vrot.slane %v301, 4
        %v309 = vrot.slane %v302, 4
        %v310 = vsel %vm307, %v308, %v309
        %v311 = vrot.slane %v303, 4
        %v312 = vsel %vm307, %v309, %v311
        %v315 = vadd.f32 %v273, %v310
        %v316 = vadd.f32 %v274, %v312
        %s317 = sld [smem:[#allocation9 + $0x23]]
        %v318 = vstv %s317
        %v319 = vmul.f32 %v318, %v264
        %v320 = vmul.f32 %v318, %v266
        %v321 = vmul.f32 %v318, %v268
        %v325 = vrot.slane %v319, 4
        %v326 = vrot.slane %v320, 4
        %v327 = vsel %vm307, %v325, %v326
        %v328 = vrot.slane %v321, 4
        %v329 = vsel %vm307, %v326, %v328
        %v333 = vadd.f32 %v280, %v327
        %v334 = vadd.f32 %v281, %v329
        %v335 = vadd.f32 %v282, %v328
        %s336 = sld [smem:[#allocation9 + $0x2a]]
        %v337 = vstv %s336
        %v338 = vmul.f32 %v337, %v264
        %v339 = vmul.f32 %v337, %v266
        %v340 = vmul.f32 %v337, %v268
        %v344 = vrot.slane %v338, 4
        %v345 = vrot.slane %v339, 4
        %v346 = vsel %vm307, %v344, %v345
        %v347 = vrot.slane %v340, 4
        %v348 = vsel %vm307, %v345, %v347
        %v352 = vadd.f32 %v288, %v346
        %v353 = vadd.f32 %v289, %v348
        %v354 = vadd.f32 %v290, %v347
        %355 = vrot.lane.b32.xlu0 %v260, 2
        %v356 = vpop.permute.xlu0 %355
        %357 = vrot.lane.b32.xlu0 %v261, 2
        %v358 = vpop.permute.xlu0 %357
        %359 = vrot.lane.b32.xlu0 %v262, 2
        %v360 = vpop.permute.xlu0 %359
        %s361 = sld [smem:[#allocation9 + $0x1]]
        %v362 = vstv %s361
        %v363 = vmul.f32 %v362, %v356
        %v364 = vmul.f32 %v362, %v358
        %vm367 = vcmask 1042432
        %v368 = vrot.slane %v363, 5
        %v369 = vrot.slane %v364, 5
        %v370 = vsel %vm367, %v368, %v369
        %v374 = vadd.f32 %v296, %v368
        %v375 = vadd.f32 %v297, %v370
        %v376 = vadd.f32 %v298, %v369
        %s377 = sld [smem:[#allocation9 + $0x8]]
        %v378 = vstv %s377
        %v379 = vmul.f32 %v378, %v356
        %v380 = vmul.f32 %v378, %v358
        %v381 = vmul.f32 %v378, %v360
        %vm385 = vcmask 1046528
        %v386 = vrot.slane %v379, 1
        %v387 = vrot.slane %v380, 1
        %v388 = vsel %vm385, %v386, %v387
        %v389 = vrot.slane %v381, 1
        %v390 = vsel %vm385, %v387, %v389
        %v393 = vadd.f32 %v315, %v388
        %v394 = vadd.f32 %v316, %v390
        %s395 = sld [smem:[#allocation9 + $0xf]]
        %v396 = vstv %s395
        %v397 = vmul.f32 %v396, %v356
        %v398 = vmul.f32 %v396, %v358
        %v399 = vmul.f32 %v396, %v360
        %v403 = vrot.slane %v397, 1
        %v404 = vrot.slane %v398, 1
        %v405 = vsel %vm385, %v403, %v404
        %v406 = vrot.slane %v399, 1
        %v407 = vsel %vm385, %v404, %v406
        %v411 = vadd.f32 %v333, %v405
        %v412 = vadd.f32 %v334, %v407
        %v413 = vadd.f32 %v335, %v406
        %s414 = sld [smem:[#allocation9 + $0x16]]
        %v415 = vstv %s414
        %v416 = vmul.f32 %v415, %v356
        %v417 = vmul.f32 %v415, %v358
        %v418 = vmul.f32 %v415, %v360
        %v422 = vrot.slane %v416, 1
        %v423 = vrot.slane %v417, 1
        %v424 = vsel %vm385, %v422, %v423
        %v425 = vrot.slane %v418, 1
        %v426 = vsel %vm385, %v423, %v425
        %v430 = vadd.f32 %v352, %v424
        %v431 = vadd.f32 %v353, %v426
        %v432 = vadd.f32 %v354, %v425
        %s433 = sld [smem:[#allocation9 + $0x1d]]
        %v434 = vstv %s433
        %v435 = vmul.f32 %v434, %v356
        %v436 = vmul.f32 %v434, %v358
        %v437 = vmul.f32 %v434, %v360
        %v441 = vrot.slane %v435, 1
        %v442 = vrot.slane %v436, 1
        %v443 = vsel %vm385, %v441, %v442
        %v444 = vrot.slane %v437, 1
        %v445 = vsel %vm385, %v442, %v444
        %v449 = vadd.f32 %v374, %v443
        %v450 = vadd.f32 %v375, %v445
        %v451 = vadd.f32 %v376, %v444
        %s452 = sld [smem:[#allocation9 + $0x24]]
        %v453 = vstv %s452
        %v454 = vmul.f32 %v453, %v356
        %v455 = vmul.f32 %v453, %v358
        %v456 = vmul.f32 %v453, %v360
        %v460 = vrot.slane %v454, 5
        %v461 = vrot.slane %v455, 5
        %v462 = vsel %vm367, %v460, %v461
        %v463 = vrot.slane %v456, 5
        %v464 = vsel %vm367, %v461, %v463
        %v467 = vadd.f32 %v393, %v462
        %v468 = vadd.f32 %v394, %v464
        %s469 = sld [smem:[#allocation9 + $0x2b]]
        %v470 = vstv %s469
        %v471 = vmul.f32 %v470, %v356
        %v472 = vmul.f32 %v470, %v358
        %v473 = vmul.f32 %v470, %v360
        %v477 = vrot.slane %v471, 5
        %v478 = vrot.slane %v472, 5
        %v479 = vsel %vm367, %v477, %v478
        %v480 = vrot.slane %v473, 5
        %v481 = vsel %vm367, %v478, %v480
        %v485 = vadd.f32 %v411, %v479
        %v486 = vadd.f32 %v412, %v481
        %v487 = vadd.f32 %v413, %v480
        %488 = vrot.lane.b32.xlu0 %v260, 1
        %v489 = vpop.permute.xlu0 %488
        %490 = vrot.lane.b32.xlu0 %v261, 1
        %v491 = vpop.permute.xlu0 %490
        %492 = vrot.lane.b32.xlu0 %v262, 1
        %v493 = vpop.permute.xlu0 %492
        %s494 = sld [smem:[#allocation9 + $0x2]]
        %v495 = vstv %s494
        %v496 = vmul.f32 %v495, %v489
        %v497 = vmul.f32 %v495, %v491
        %vm500 = vcmask 1041408
        %v501 = vrot.slane %v496, 6
        %v502 = vrot.slane %v497, 6
        %v503 = vsel %vm500, %v501, %v502
        %v507 = vadd.f32 %v430, %v501
        %v508 = vadd.f32 %v431, %v503
        %v509 = vadd.f32 %v432, %v502
        %s510 = sld [smem:[#allocation9 + $0x9]]
        %v511 = vstv %s510
        %v512 = vmul.f32 %v511, %v489
        %v513 = vmul.f32 %v511, %v491
        %v514 = vmul.f32 %v511, %v493
        %v518 = vrot.slane %v512, 6
        %v519 = vrot.slane %v513, 6
        %v520 = vsel %vm500, %v518, %v519
        %v521 = vrot.slane %v514, 6
        %v522 = vsel %vm500, %v519, %v521
        %v526 = vadd.f32 %v449, %v518
        %v527 = vadd.f32 %v450, %v520
        %v528 = vadd.f32 %v451, %v522
        %s529 = sld [smem:[#allocation9 + $0x10]]
        %v530 = vstv %s529
        %v531 = vmul.f32 %v530, %v489
        %v532 = vmul.f32 %v530, %v491
        %v533 = vmul.f32 %v530, %v493
        %vm537 = vcmask 1045504
        %v538 = vrot.slane %v531, 2
        %v539 = vrot.slane %v532, 2
        %v540 = vsel %vm537, %v538, %v539
        %v541 = vrot.slane %v533, 2
        %v542 = vsel %vm537, %v539, %v541
        %v545 = vadd.f32 %v467, %v540
        %v546 = vadd.f32 %v468, %v542
        %s547 = sld [smem:[#allocation9 + $0x17]]
        %v548 = vstv %s547
        %v549 = vmul.f32 %v548, %v489
        %v550 = vmul.f32 %v548, %v491
        %v551 = vmul.f32 %v548, %v493
        %v555 = vrot.slane %v549, 2
        %v556 = vrot.slane %v550, 2
        %v557 = vsel %vm537, %v555, %v556
        %v558 = vrot.slane %v551, 2
        %v559 = vsel %vm537, %v556, %v558
        %v563 = vadd.f32 %v485, %v557
        %v564 = vadd.f32 %v486, %v559
        %v565 = vadd.f32 %v487, %v558
        %s566 = sld [smem:[#allocation9 + $0x1e]]
        %v567 = vstv %s566
        %v568 = vmul.f32 %v567, %v489
        %v569 = vmul.f32 %v567, %v491
        %v570 = vmul.f32 %v567, %v493
        %v574 = vrot.slane %v568, 2
        %v575 = vrot.slane %v569, 2
        %v576 = vsel %vm537, %v574, %v575
        %v577 = vrot.slane %v570, 2
        %v578 = vsel %vm537, %v575, %v577
        %v582 = vadd.f32 %v507, %v576
        %v583 = vadd.f32 %v508, %v578
        %v584 = vadd.f32 %v509, %v577
        %s585 = sld [smem:[#allocation9 + $0x25]]
        %v586 = vstv %s585
        %v587 = vmul.f32 %v586, %v489
        %v588 = vmul.f32 %v586, %v491
        %v589 = vmul.f32 %v586, %v493
        %v593 = vrot.slane %v587, 2
        %v594 = vrot.slane %v588, 2
        %v595 = vsel %vm537, %v593, %v594
        %v596 = vrot.slane %v589, 2
        %v597 = vsel %vm537, %v594, %v596
        %v601 = vadd.f32 %v526, %v595
        %v602 = vadd.f32 %v527, %v597
        %v603 = vadd.f32 %v528, %v596
        %s604 = sld [smem:[#allocation9 + $0x2c]]
        %v605 = vstv %s604
        %v606 = vmul.f32 %v605, %v489
        %v607 = vmul.f32 %v605, %v491
        %v608 = vmul.f32 %v605, %v493
        %v612 = vrot.slane %v606, 6
        %v613 = vrot.slane %v607, 6
        %v614 = vsel %vm500, %v612, %v613
        %v615 = vrot.slane %v608, 6
        %v616 = vsel %vm500, %v613, %v615
        %v619 = vadd.f32 %v545, %v614
        %v620 = vadd.f32 %v546, %v616
        %s621 = sld [smem:[#allocation9 + $0x3]]
        %v622 = vstv %s621
        %v623 = vmul.f32 %v622, %v260
        %v624 = vmul.f32 %v622, %v261
        %vm627 = vcmask 1040384
        %v628 = vrot.slane %v623, 7
        %v629 = vrot.slane %v624, 7
        %v630 = vsel %vm627, %v628, %v629
        %v634 = vadd.f32 %v563, %v628
        %v635 = vadd.f32 %v564, %v630
        %v636 = vadd.f32 %v565, %v629
        %s637 = sld [smem:[#allocation9 + $0xa]]
        %v638 = vstv %s637
        %v639 = vmul.f32 %v638, %v260
        %v640 = vmul.f32 %v638, %v261
        %v641 = vmul.f32 %v638, %v262
        %v645 = vrot.slane %v639, 7
        %v646 = vrot.slane %v640, 7
        %v647 = vsel %vm627, %v645, %v646
        %v648 = vrot.slane %v641, 7
        %v649 = vsel %vm627, %v646, %v648
        %v653 = vadd.f32 %v582, %v645
        %v654 = vadd.f32 %v583, %v647
        %v655 = vadd.f32 %v584, %v649
        %s656 = sld [smem:[#allocation9 + $0x11]]
        %v657 = vstv %s656
        %v658 = vmul.f32 %v657, %v260
        %v659 = vmul.f32 %v657, %v261
        %v660 = vmul.f32 %v657, %v262
        %v664 = vrot.slane %v658, 7
        %v665 = vrot.slane %v659, 7
        %v666 = vsel %vm627, %v664, %v665
        %v667 = vrot.slane %v660, 7
        %v668 = vsel %vm627, %v665, %v667
        %v672 = vadd.f32 %v601, %v664
        %v673 = vadd.f32 %v602, %v666
        %v674 = vadd.f32 %v603, %v668
        %s675 = sld [smem:[#allocation9 + $0x18]]
        %v676 = vstv %s675
        %v677 = vmul.f32 %v676, %v260
        %v678 = vmul.f32 %v676, %v261
        %v679 = vmul.f32 %v676, %v262
        %vm683 = vcmask 1044480
        %v684 = vrot.slane %v677, 3
        %v685 = vrot.slane %v678, 3
        %v686 = vsel %vm683, %v684, %v685
        %v687 = vrot.slane %v679, 3
        %v688 = vsel %vm683, %v685, %v687
        %v691 = vadd.f32 %v619, %v686
        %v692 = vadd.f32 %v620, %v688
        %s693 = sld [smem:[#allocation9 + $0x1f]]
        %v694 = vstv %s693
        %v695 = vmul.f32 %v694, %v260
        %v696 = vmul.f32 %v694, %v261
        %v697 = vmul.f32 %v694, %v262
        %v701 = vrot.slane %v695, 3
        %v702 = vrot.slane %v696, 3
        %v703 = vsel %vm683, %v701, %v702
        %v704 = vrot.slane %v697, 3
        %v705 = vsel %vm683, %v702, %v704
        %v709 = vadd.f32 %v634, %v703
        %v710 = vadd.f32 %v635, %v705
        %v711 = vadd.f32 %v636, %v704
        %s712 = sld [smem:[#allocation9 + $0x26]]
        %v713 = vstv %s712
        %v714 = vmul.f32 %v713, %v260
        %v715 = vmul.f32 %v713, %v261
        %v716 = vmul.f32 %v713, %v262
        %v720 = vrot.slane %v714, 3
        %v721 = vrot.slane %v715, 3
        %v722 = vsel %vm683, %v720, %v721
        %v723 = vrot.slane %v716, 3
        %v724 = vsel %vm683, %v721, %v723
        %v728 = vadd.f32 %v653, %v722
        %v729 = vadd.f32 %v654, %v724
        %v730 = vadd.f32 %v655, %v723
        %s731 = sld [smem:[#allocation9 + $0x2d]]
        %v732 = vstv %s731
        %v733 = vmul.f32 %v732, %v260
        %v734 = vmul.f32 %v732, %v261
        %v735 = vmul.f32 %v732, %v262
        %v739 = vrot.slane %v733, 3
        %v740 = vrot.slane %v734, 3
        %v741 = vsel %vm683, %v739, %v740
        %v742 = vrot.slane %v735, 3
        %v743 = vsel %vm683, %v740, %v742
        %v747 = vadd.f32 %v672, %v741
        %v748 = vadd.f32 %v673, %v743
        %v749 = vadd.f32 %v674, %v742
        %750 = vrot.lane.b32.xlu0 %v260, 127
        %v751 = vpop.permute.xlu0 %750
        %752 = vrot.lane.b32.xlu0 %v261, 127
        %v753 = vpop.permute.xlu0 %752
        %754 = vrot.lane.b32.xlu0 %v262, 127
        %v755 = vpop.permute.xlu0 %754
        %s756 = sld [smem:[#allocation9 + $0x4]]
        %v757 = vstv %s756
        %v758 = vmul.f32 %v757, %v751
        %v759 = vmul.f32 %v757, %v753
        %v760 = vadd.f32 %v691, %v758
        %v761 = vadd.f32 %v692, %v759
        %s762 = sld [smem:[#allocation9 + $0xb]]
        %v763 = vstv %s762
        %v764 = vmul.f32 %v763, %v751
        %v765 = vmul.f32 %v763, %v753
        %v766 = vmul.f32 %v763, %v755
        %v767 = vadd.f32 %v709, %v764
        %v768 = vadd.f32 %v710, %v765
        %v769 = vadd.f32 %v711, %v766
        %s770 = sld [smem:[#allocation9 + $0x12]]
        %v771 = vstv %s770
        %v772 = vmul.f32 %v771, %v751
        %v773 = vmul.f32 %v771, %v753
        %v774 = vmul.f32 %v771, %v755
        %v775 = vadd.f32 %v728, %v772
        %v776 = vadd.f32 %v729, %v773
        %v777 = vadd.f32 %v730, %v774
        %s778 = sld [smem:[#allocation9 + $0x19]]
        %v779 = vstv %s778
        %v780 = vmul.f32 %v779, %v751
        %v781 = vmul.f32 %v779, %v753
        %v782 = vmul.f32 %v779, %v755
        %v783 = vadd.f32 %v747, %v780
        %v784 = vadd.f32 %v748, %v781
        %v785 = vadd.f32 %v749, %v782
        %s786 = sld [smem:[#allocation9 + $0x20]]
        %v787 = vstv %s786
        %v788 = vmul.f32 %v787, %v751
        %v789 = vmul.f32 %v787, %v753
        %v790 = vmul.f32 %v787, %v755
        %v794 = vrot.slane %v788, 4
        %v795 = vrot.slane %v789, 4
        %v796 = vsel %vm307, %v794, %v795
        %v797 = vrot.slane %v790, 4
        %v798 = vsel %vm307, %v795, %v797
        %v801 = vadd.f32 %v760, %v796
        %v802 = vadd.f32 %v761, %v798
        %s803 = sld [smem:[#allocation9 + $0x27]]
        %v804 = vstv %s803
        %v805 = vmul.f32 %v804, %v751
        %v806 = vmul.f32 %v804, %v753
        %v807 = vmul.f32 %v804, %v755
        %v811 = vrot.slane %v805, 4
        %v812 = vrot.slane %v806, 4
        %v813 = vsel %vm307, %v811, %v812
        %v814 = vrot.slane %v807, 4
        %v815 = vsel %vm307, %v812, %v814
        %v819 = vadd.f32 %v767, %v813
        %v820 = vadd.f32 %v768, %v815
        %v821 = vadd.f32 %v769, %v814
        %s822 = sld [smem:[#allocation9 + $0x2e]]
        %v823 = vstv %s822
        %v824 = vmul.f32 %v823, %v751
        %v825 = vmul.f32 %v823, %v753
        %v826 = vmul.f32 %v823, %v755
        %v830 = vrot.slane %v824, 4
        %v831 = vrot.slane %v825, 4
        %v832 = vsel %vm307, %v830, %v831
        %v833 = vrot.slane %v826, 4
        %v834 = vsel %vm307, %v831, %v833
        %v838 = vadd.f32 %v775, %v832
        %v839 = vadd.f32 %v776, %v834
        %v840 = vadd.f32 %v777, %v833
        %841 = vrot.lane.b32.xlu0 %v260, 126
        %v842 = vpop.permute.xlu0 %841
        %843 = vrot.lane.b32.xlu0 %v261, 126
        %v844 = vpop.permute.xlu0 %843
        %845 = vrot.lane.b32.xlu0 %v262, 126
        %v846 = vpop.permute.xlu0 %845
        %s847 = sld [smem:[#allocation9 + $0x5]]
        %v848 = vstv %s847
        %v849 = vmul.f32 %v848, %v842
        %v850 = vmul.f32 %v848, %v844
        %v853 = vrot.slane %v849, 5
        %v854 = vrot.slane %v850, 5
        %v855 = vsel %vm367, %v853, %v854
        %v859 = vadd.f32 %v783, %v853
        %v860 = vadd.f32 %v784, %v855
        %v861 = vadd.f32 %v785, %v854
        %s862 = sld [smem:[#allocation9 + $0xc]]
        %v863 = vstv %s862
        %v864 = vmul.f32 %v863, %v842
        %v865 = vmul.f32 %v863, %v844
        %v866 = vmul.f32 %v863, %v846
        %v870 = vrot.slane %v864, 1
        %v871 = vrot.slane %v865, 1
        %v872 = vsel %vm385, %v870, %v871
        %v873 = vrot.slane %v866, 1
        %v874 = vsel %vm385, %v871, %v873
        %v877 = vadd.f32 %v801, %v872
        %v878 = vadd.f32 %v802, %v874
        %s879 = sld [smem:[#allocation9 + $0x13]]
        %v880 = vstv %s879
        %v881 = vmul.f32 %v880, %v842
        %v882 = vmul.f32 %v880, %v844
        %v883 = vmul.f32 %v880, %v846
        %v887 = vrot.slane %v881, 1
        %v888 = vrot.slane %v882, 1
        %v889 = vsel %vm385, %v887, %v888
        %v890 = vrot.slane %v883, 1
        %v891 = vsel %vm385, %v888, %v890
        %v895 = vadd.f32 %v819, %v889
        %v896 = vadd.f32 %v820, %v891
        %v897 = vadd.f32 %v821, %v890
        %s898 = sld [smem:[#allocation9 + $0x1a]]
        %v899 = vstv %s898
        %v900 = vmul.f32 %v899, %v842
        %v901 = vmul.f32 %v899, %v844
        %v902 = vmul.f32 %v899, %v846
        %v906 = vrot.slane %v900, 1
        %v907 = vrot.slane %v901, 1
        %v908 = vsel %vm385, %v906, %v907
        %v909 = vrot.slane %v902, 1
        %v910 = vsel %vm385, %v907, %v909
        %v914 = vadd.f32 %v838, %v908
        %v915 = vadd.f32 %v839, %v910
        %v916 = vadd.f32 %v840, %v909
        %s917 = sld [smem:[#allocation9 + $0x21]]
        %v918 = vstv %s917
        %v919 = vmul.f32 %v918, %v842
        %v920 = vmul.f32 %v918, %v844
        %v921 = vmul.f32 %v918, %v846
        %v925 = vrot.slane %v919, 1
        %v926 = vrot.slane %v920, 1
        %v927 = vsel %vm385, %v925, %v926
        %v928 = vrot.slane %v921, 1
        %v929 = vsel %vm385, %v926, %v928
        %v933 = vadd.f32 %v859, %v927
        %v934 = vadd.f32 %v860, %v929
        %v935 = vadd.f32 %v861, %v928
        %s936 = sld [smem:[#allocation9 + $0x28]]
        %v937 = vstv %s936
        %v938 = vmul.f32 %v937, %v842
        %v939 = vmul.f32 %v937, %v844
        %v940 = vmul.f32 %v937, %v846
        %v944 = vrot.slane %v938, 5
        %v945 = vrot.slane %v939, 5
        %v946 = vsel %vm367, %v944, %v945
        %v947 = vrot.slane %v940, 5
        %v948 = vsel %vm367, %v945, %v947
        %v951 = vadd.f32 %v877, %v946
        %v952 = vadd.f32 %v878, %v948
        %s953 = sld [smem:[#allocation9 + $0x2f]]
        %v954 = vstv %s953
        %v955 = vmul.f32 %v954, %v842
        %v956 = vmul.f32 %v954, %v844
        %v957 = vmul.f32 %v954, %v846
        %v961 = vrot.slane %v955, 5
        %v962 = vrot.slane %v956, 5
        %v963 = vsel %vm367, %v961, %v962
        %v964 = vrot.slane %v957, 5
        %v965 = vsel %vm367, %v962, %v964
        %v969 = vadd.f32 %v895, %v963
        %v970 = vadd.f32 %v896, %v965
        %v971 = vadd.f32 %v897, %v964
        %972 = vrot.lane.b32.xlu0 %v260, 125
        %v973 = vpop.permute.xlu0 %972
        %974 = vrot.lane.b32.xlu0 %v261, 125
        %v975 = vpop.permute.xlu0 %974
        %976 = vrot.lane.b32.xlu0 %v262, 125
        %v977 = vpop.permute.xlu0 %976
        %s978 = sld [smem:[#allocation9 + $0x6]]
        %v979 = vstv %s978
        %v980 = vmul.f32 %v979, %v973
        %v981 = vmul.f32 %v979, %v975
        %v984 = vrot.slane %v980, 6
        %v985 = vrot.slane %v981, 6
        %v986 = vsel %vm500, %v984, %v985
        %v990 = vadd.f32 %v914, %v984
        %v991 = vadd.f32 %v915, %v986
        %v992 = vadd.f32 %v916, %v985
        %s993 = sld [smem:[#allocation9 + $0xd]]
        %v994 = vstv %s993
        %v995 = vmul.f32 %v994, %v973
        %v996 = vmul.f32 %v994, %v975
        %v997 = vmul.f32 %v994, %v977
        %v1001 = vrot.slane %v995, 6
        %v1002 = vrot.slane %v996, 6
        %v1003 = vsel %vm500, %v1001, %v1002
        %v1004 = vrot.slane %v997, 6
        %v1005 = vsel %vm500, %v1002, %v1004
        %v1009 = vadd.f32 %v933, %v1001
        %v1010 = vadd.f32 %v934, %v1003
        %v1011 = vadd.f32 %v935, %v1005
        %s1012 = sld [smem:[#allocation9 + $0x14]]
        %v1013 = vstv %s1012
        %v1014 = vmul.f32 %v1013, %v973
        %v1015 = vmul.f32 %v1013, %v975
        %v1016 = vmul.f32 %v1013, %v977
        %v1020 = vrot.slane %v1014, 2
        %v1021 = vrot.slane %v1015, 2
        %v1022 = vsel %vm537, %v1020, %v1021
        %v1023 = vrot.slane %v1016, 2
        %v1024 = vsel %vm537, %v1021, %v1023
        %v1027 = vadd.f32 %v951, %v1022
        %v1028 = vadd.f32 %v952, %v1024
        %s1029 = sld [smem:[#allocation9 + $0x1b]]
        %v1030 = vstv %s1029
        %v1031 = vmul.f32 %v1030, %v973
        %v1032 = vmul.f32 %v1030, %v975
        %v1033 = vmul.f32 %v1030, %v977
        %v1037 = vrot.slane %v1031, 2
        %v1038 = vrot.slane %v1032, 2
        %v1039 = vsel %vm537, %v1037, %v1038
        %v1040 = vrot.slane %v1033, 2
        %v1041 = vsel %vm537, %v1038, %v1040
        %v1045 = vadd.f32 %v969, %v1039
        %v1046 = vadd.f32 %v970, %v1041
        %v1047 = vadd.f32 %v971, %v1040
        %s1048 = sld [smem:[#allocation9 + $0x22]]
        %v1049 = vstv %s1048
        %v1050 = vmul.f32 %v1049, %v973
        %v1051 = vmul.f32 %v1049, %v975
        %v1052 = vmul.f32 %v1049, %v977
        %v1056 = vrot.slane %v1050, 2
        %v1057 = vrot.slane %v1051, 2
        %v1058 = vsel %vm537, %v1056, %v1057
        %v1059 = vrot.slane %v1052, 2
        %v1060 = vsel %vm537, %v1057, %v1059
        %v1064 = vadd.f32 %v990, %v1058
        %v1065 = vadd.f32 %v991, %v1060
        %v1066 = vadd.f32 %v992, %v1059
        %s1067 = sld [smem:[#allocation9 + $0x29]]
        %v1068 = vstv %s1067
        %v1069 = vmul.f32 %v1068, %v973
        %v1070 = vmul.f32 %v1068, %v975
        %v1071 = vmul.f32 %v1068, %v977
        %v1075 = vrot.slane %v1069, 2
        %v1076 = vrot.slane %v1070, 2
        %v1077 = vsel %vm537, %v1075, %v1076
        %v1078 = vrot.slane %v1071, 2
        %v1079 = vsel %vm537, %v1076, %v1078
        %v1083 = vadd.f32 %v1009, %v1077
        %v1084 = vadd.f32 %v1010, %v1079
        %v1085 = vadd.f32 %v1011, %v1078
        %s1086 = sld [smem:[#allocation9 + $0x30]]
        %v1087 = vstv %s1086
        %v1088 = vmul.f32 %v1087, %v973
        %v1089 = vmul.f32 %v1087, %v975
        %v1090 = vmul.f32 %v1087, %v977
        %v1094 = vrot.slane %v1088, 6
        %v1095 = vrot.slane %v1089, 6
        %v1096 = vsel %vm500, %v1094, %v1095
        %v1097 = vrot.slane %v1090, 6
        %v1098 = vsel %vm500, %v1095, %v1097
        %v1101 = vadd.f32 %v1027, %v1096
        %v1102 = vadd.f32 %v1028, %v1098
        %v1103 = vld [vmem:[#allocation3 + $0x5] sm:$0xff]
        %v1104 = vld [vmem:[#allocation3 + $0xd] sm:$0xff]
        %v1105 = vld [vmem:[#allocation3 + $0x15] sm:$0x3f]
        %1106 = vrot.lane.b32.xlu0 %v1103, 3
        %v1107 = vpop.permute.xlu0 %1106
        %1108 = vrot.lane.b32.xlu0 %v1104, 3
        %v1109 = vpop.permute.xlu0 %1108
        %1110 = vrot.lane.b32.xlu0 %v1105, 3
        %v1111 = vpop.permute.xlu0 %1110
        %s1112 = sld [smem:[#allocation9 + $0x31]]
        %v1113 = vstv %s1112
        %v1114 = vmul.f32 %v1113, %v1107
        %v1115 = vmul.f32 %v1113, %v1109
        %v1118 = vrot.slane %v1114, 7
        %v1119 = vrot.slane %v1115, 7
        %v1120 = vsel %vm627, %v1118, %v1119
        %v1124 = vadd.f32 %v1045, %v1118
        %v1125 = vadd.f32 %v1046, %v1120
        %v1126 = vadd.f32 %v1047, %v1119
        %s1127 = sld [smem:[#allocation9 + $0x38]]
        %v1128 = vstv %s1127
        %v1129 = vmul.f32 %v1128, %v1107
        %v1130 = vmul.f32 %v1128, %v1109
        %v1131 = vmul.f32 %v1128, %v1111
        %v1135 = vrot.slane %v1129, 7
        %v1136 = vrot.slane %v1130, 7
        %v1137 = vsel %vm627, %v1135, %v1136
        %v1138 = vrot.slane %v1131, 7
        %v1139 = vsel %vm627, %v1136, %v1138
        %v1143 = vadd.f32 %v1064, %v1135
        %v1144 = vadd.f32 %v1065, %v1137
        %v1145 = vadd.f32 %v1066, %v1139
        %s1146 = sld [smem:[#allocation9 + $0x3f]]
        %v1147 = vstv %s1146
        %v1148 = vmul.f32 %v1147, %v1107
        %v1149 = vmul.f32 %v1147, %v1109
        %v1150 = vmul.f32 %v1147, %v1111
        %v1154 = vrot.slane %v1148, 7
        %v1155 = vrot.slane %v1149, 7
        %v1156 = vsel %vm627, %v1154, %v1155
        %v1157 = vrot.slane %v1150, 7
        %v1158 = vsel %vm627, %v1155, %v1157
        %v1162 = vadd.f32 %v1083, %v1154
        %v1163 = vadd.f32 %v1084, %v1156
        %v1164 = vadd.f32 %v1085, %v1158
        %s1165 = sld [smem:[#allocation9 + $0x46]]
        %v1166 = vstv %s1165
        %v1167 = vmul.f32 %v1166, %v1107
        %v1168 = vmul.f32 %v1166, %v1109
        %v1169 = vmul.f32 %v1166, %v1111
        %v1173 = vrot.slane %v1167, 3
        %v1174 = vrot.slane %v1168, 3
        %v1175 = vsel %vm683, %v1173, %v1174
        %v1176 = vrot.slane %v1169, 3
        %v1177 = vsel %vm683, %v1174, %v1176
        %v1180 = vadd.f32 %v1101, %v1175
        %v1181 = vadd.f32 %v1102, %v1177
        %s1182 = sld [smem:[#allocation9 + $0x4d]]
        %v1183 = vstv %s1182
        %v1184 = vmul.f32 %v1183, %v1107
        %v1185 = vmul.f32 %v1183, %v1109
        %v1186 = vmul.f32 %v1183, %v1111
        %v1190 = vrot.slane %v1184, 3
        %v1191 = vrot.slane %v1185, 3
        %v1192 = vsel %vm683, %v1190, %v1191
        %v1193 = vrot.slane %v1186, 3
        %v1194 = vsel %vm683, %v1191, %v1193
        %v1198 = vadd.f32 %v1124, %v1192
        %v1199 = vadd.f32 %v1125, %v1194
        %v1200 = vadd.f32 %v1126, %v1193
        %s1201 = sld [smem:[#allocation9 + $0x54]]
        %v1202 = vstv %s1201
        %v1203 = vmul.f32 %v1202, %v1107
        %v1204 = vmul.f32 %v1202, %v1109
        %v1205 = vmul.f32 %v1202, %v1111
        %v1209 = vrot.slane %v1203, 3
        %v1210 = vrot.slane %v1204, 3
        %v1211 = vsel %vm683, %v1209, %v1210
        %v1212 = vrot.slane %v1205, 3
        %v1213 = vsel %vm683, %v1210, %v1212
        %v1217 = vadd.f32 %v1143, %v1211
        %v1218 = vadd.f32 %v1144, %v1213
        %v1219 = vadd.f32 %v1145, %v1212
        %s1220 = sld [smem:[#allocation9 + $0x5b]]
        %v1221 = vstv %s1220
        %v1222 = vmul.f32 %v1221, %v1107
        %v1223 = vmul.f32 %v1221, %v1109
        %v1224 = vmul.f32 %v1221, %v1111
        %v1228 = vrot.slane %v1222, 3
        %v1229 = vrot.slane %v1223, 3
        %v1230 = vsel %vm683, %v1228, %v1229
        %v1231 = vrot.slane %v1224, 3
        %v1232 = vsel %vm683, %v1229, %v1231
        %v1236 = vadd.f32 %v1162, %v1230
        %v1237 = vadd.f32 %v1163, %v1232
        %v1238 = vadd.f32 %v1164, %v1231
        %1239 = vrot.lane.b32.xlu0 %v1103, 2
        %v1240 = vpop.permute.xlu0 %1239
        %1241 = vrot.lane.b32.xlu0 %v1104, 2
        %v1242 = vpop.permute.xlu0 %1241
        %1243 = vrot.lane.b32.xlu0 %v1105, 2
        %v1244 = vpop.permute.xlu0 %1243
        %s1245 = sld [smem:[#allocation9 + $0x32]]
        %v1246 = vstv %s1245
        %v1247 = vmul.f32 %v1246, %v1240
        %v1248 = vmul.f32 %v1246, %v1242
        %v1249 = vadd.f32 %v1180, %v1247
        %v1250 = vadd.f32 %v1181, %v1248
        %s1251 = sld [smem:[#allocation9 + $0x39]]
        %v1252 = vstv %s1251
        %v1253 = vmul.f32 %v1252, %v1240
        %v1254 = vmul.f32 %v1252, %v1242
        %v1255 = vmul.f32 %v1252, %v1244
        %v1256 = vadd.f32 %v1198, %v1253
        %v1257 = vadd.f32 %v1199, %v1254
        %v1258 = vadd.f32 %v1200, %v1255
        %s1259 = sld [smem:[#allocation9 + $0x40]]
        %v1260 = vstv %s1259
        %v1261 = vmul.f32 %v1260, %v1240
        %v1262 = vmul.f32 %v1260, %v1242
        %v1263 = vmul.f32 %v1260, %v1244
        %v1264 = vadd.f32 %v1217, %v1261
        %v1265 = vadd.f32 %v1218, %v1262
        %v1266 = vadd.f32 %v1219, %v1263
        %s1267 = sld [smem:[#allocation9 + $0x47]]
        %v1268 = vstv %s1267
        %v1269 = vmul.f32 %v1268, %v1240
        %v1270 = vmul.f32 %v1268, %v1242
        %v1271 = vmul.f32 %v1268, %v1244
        %v1272 = vadd.f32 %v1236, %v1269
        %v1273 = vadd.f32 %v1237, %v1270
        %v1274 = vadd.f32 %v1238, %v1271
        %s1275 = sld [smem:[#allocation9 + $0x4e]]
        %v1276 = vstv %s1275
        %v1277 = vmul.f32 %v1276, %v1240
        %v1278 = vmul.f32 %v1276, %v1242
        %v1279 = vmul.f32 %v1276, %v1244
        %v1283 = vrot.slane %v1277, 4
        %v1284 = vrot.slane %v1278, 4
        %v1285 = vsel %vm307, %v1283, %v1284
        %v1286 = vrot.slane %v1279, 4
        %v1287 = vsel %vm307, %v1284, %v1286
        %v1290 = vadd.f32 %v1249, %v1285
        %v1291 = vadd.f32 %v1250, %v1287
        %s1292 = sld [smem:[#allocation9 + $0x55]]
        %v1293 = vstv %s1292
        %v1294 = vmul.f32 %v1293, %v1240
        %v1295 = vmul.f32 %v1293, %v1242
        %v1296 = vmul.f32 %v1293, %v1244
        %v1300 = vrot.slane %v1294, 4
        %v1301 = vrot.slane %v1295, 4
        %v1302 = vsel %vm307, %v1300, %v1301
        %v1303 = vrot.slane %v1296, 4
        %v1304 = vsel %vm307, %v1301, %v1303
        %v1308 = vadd.f32 %v1256, %v1302
        %v1309 = vadd.f32 %v1257, %v1304
        %v1310 = vadd.f32 %v1258, %v1303
        %s1311 = sld [smem:[#allocation9 + $0x5c]]
        %v1312 = vstv %s1311
        %v1313 = vmul.f32 %v1312, %v1240
        %v1314 = vmul.f32 %v1312, %v1242
        %v1315 = vmul.f32 %v1312, %v1244
        %v1319 = vrot.slane %v1313, 4
        %v1320 = vrot.slane %v1314, 4
        %v1321 = vsel %vm307, %v1319, %v1320
        %v1322 = vrot.slane %v1315, 4
        %v1323 = vsel %vm307, %v1320, %v1322
        %v1327 = vadd.f32 %v1264, %v1321
        %v1328 = vadd.f32 %v1265, %v1323
        %v1329 = vadd.f32 %v1266, %v1322
        %1330 = vrot.lane.b32.xlu0 %v1103, 1
        %v1331 = vpop.permute.xlu0 %1330
        %1332 = vrot.lane.b32.xlu0 %v1104, 1
        %v1333 = vpop.permute.xlu0 %1332
        %1334 = vrot.lane.b32.xlu0 %v1105, 1
        %v1335 = vpop.permute.xlu0 %1334
        %s1336 = sld [smem:[#allocation9 + $0x33]]
        %v1337 = vstv %s1336
        %v1338 = vmul.f32 %v1337, %v1331
        %v1339 = vmul.f32 %v1337, %v1333
        %v1342 = vrot.slane %v1338, 5
        %v1343 = vrot.slane %v1339, 5
        %v1344 = vsel %vm367, %v1342, %v1343
        %v1348 = vadd.f32 %v1272, %v1342
        %v1349 = vadd.f32 %v1273, %v1344
        %v1350 = vadd.f32 %v1274, %v1343
        %s1351 = sld [smem:[#allocation9 + $0x3a]]
        %v1352 = vstv %s1351
        %v1353 = vmul.f32 %v1352, %v1331
        %v1354 = vmul.f32 %v1352, %v1333
        %v1355 = vmul.f32 %v1352, %v1335
        %v1359 = vrot.slane %v1353, 1
        %v1360 = vrot.slane %v1354, 1
        %v1361 = vsel %vm385, %v1359, %v1360
        %v1362 = vrot.slane %v1355, 1
        %v1363 = vsel %vm385, %v1360, %v1362
        %v1366 = vadd.f32 %v1290, %v1361
        %v1367 = vadd.f32 %v1291, %v1363
        %s1368 = sld [smem:[#allocation9 + $0x41]]
        %v1369 = vstv %s1368
        %v1370 = vmul.f32 %v1369, %v1331
        %v1371 = vmul.f32 %v1369, %v1333
        %v1372 = vmul.f32 %v1369, %v1335
        %v1376 = vrot.slane %v1370, 1
        %v1377 = vrot.slane %v1371, 1
        %v1378 = vsel %vm385, %v1376, %v1377
        %v1379 = vrot.slane %v1372, 1
        %v1380 = vsel %vm385, %v1377, %v1379
        %v1384 = vadd.f32 %v1308, %v1378
        %v1385 = vadd.f32 %v1309, %v1380
        %v1386 = vadd.f32 %v1310, %v1379
        %s1387 = sld [smem:[#allocation9 + $0x48]]
        %v1388 = vstv %s1387
        %v1389 = vmul.f32 %v1388, %v1331
        %v1390 = vmul.f32 %v1388, %v1333
        %v1391 = vmul.f32 %v1388, %v1335
        %v1395 = vrot.slane %v1389, 1
        %v1396 = vrot.slane %v1390, 1
        %v1397 = vsel %vm385, %v1395, %v1396
        %v1398 = vrot.slane %v1391, 1
        %v1399 = vsel %vm385, %v1396, %v1398
        %v1403 = vadd.f32 %v1327, %v1397
        %v1404 = vadd.f32 %v1328, %v1399
        %v1405 = vadd.f32 %v1329, %v1398
        %s1406 = sld [smem:[#allocation9 + $0x4f]]
        %v1407 = vstv %s1406
        %v1408 = vmul.f32 %v1407, %v1331
        %v1409 = vmul.f32 %v1407, %v1333
        %v1410 = vmul.f32 %v1407, %v1335
        %v1414 = vrot.slane %v1408, 1
        %v1415 = vrot.slane %v1409, 1
        %v1416 = vsel %vm385, %v1414, %v1415
        %v1417 = vrot.slane %v1410, 1
        %v1418 = vsel %vm385, %v1415, %v1417
        %v1422 = vadd.f32 %v1348, %v1416
        %v1423 = vadd.f32 %v1349, %v1418
        %v1424 = vadd.f32 %v1350, %v1417
        %s1425 = sld [smem:[#allocation9 + $0x56]]
        %v1426 = vstv %s1425
        %v1427 = vmul.f32 %v1426, %v1331
        %v1428 = vmul.f32 %v1426, %v1333
        %v1429 = vmul.f32 %v1426, %v1335
        %v1433 = vrot.slane %v1427, 5
        %v1434 = vrot.slane %v1428, 5
        %v1435 = vsel %vm367, %v1433, %v1434
        %v1436 = vrot.slane %v1429, 5
        %v1437 = vsel %vm367, %v1434, %v1436
        %v1440 = vadd.f32 %v1366, %v1435
        %v1441 = vadd.f32 %v1367, %v1437
        %s1442 = sld [smem:[#allocation9 + $0x5d]]
        %v1443 = vstv %s1442
        %v1444 = vmul.f32 %v1443, %v1331
        %v1445 = vmul.f32 %v1443, %v1333
        %v1446 = vmul.f32 %v1443, %v1335
        %v1450 = vrot.slane %v1444, 5
        %v1451 = vrot.slane %v1445, 5
        %v1452 = vsel %vm367, %v1450, %v1451
        %v1453 = vrot.slane %v1446, 5
        %v1454 = vsel %vm367, %v1451, %v1453
        %v1458 = vadd.f32 %v1384, %v1452
        %v1459 = vadd.f32 %v1385, %v1454
        %v1460 = vadd.f32 %v1386, %v1453
        %s1461 = sld [smem:[#allocation9 + $0x34]]
        %v1462 = vstv %s1461
        %v1463 = vmul.f32 %v1462, %v1103
        %v1464 = vmul.f32 %v1462, %v1104
        %v1467 = vrot.slane %v1463, 6
        %v1468 = vrot.slane %v1464, 6
        %v1469 = vsel %vm500, %v1467, %v1468
        %v1473 = vadd.f32 %v1403, %v1467
        %v1474 = vadd.f32 %v1404, %v1469
        %v1475 = vadd.f32 %v1405, %v1468
        %s1476 = sld [smem:[#allocation9 + $0x3b]]
        %v1477 = vstv %s1476
        %v1478 = vmul.f32 %v1477, %v1103
        %v1479 = vmul.f32 %v1477, %v1104
        %v1480 = vmul.f32 %v1477, %v1105
        %v1484 = vrot.slane %v1478, 6
        %v1485 = vrot.slane %v1479, 6
        %v1486 = vsel %vm500, %v1484, %v1485
        %v1487 = vrot.slane %v1480, 6
        %v1488 = vsel %vm500, %v1485, %v1487
        %v1492 = vadd.f32 %v1422, %v1484
        %v1493 = vadd.f32 %v1423, %v1486
        %v1494 = vadd.f32 %v1424, %v1488
        %s1495 = sld [smem:[#allocation9 + $0x42]]
        %v1496 = vstv %s1495
        %v1497 = vmul.f32 %v1496, %v1103
        %v1498 = vmul.f32 %v1496, %v1104
        %v1499 = vmul.f32 %v1496, %v1105
        %v1503 = vrot.slane %v1497, 2
        %v1504 = vrot.slane %v1498, 2
        %v1505 = vsel %vm537, %v1503, %v1504
        %v1506 = vrot.slane %v1499, 2
        %v1507 = vsel %vm537, %v1504, %v1506
        %v1510 = vadd.f32 %v1440, %v1505
        %v1511 = vadd.f32 %v1441, %v1507
        %s1512 = sld [smem:[#allocation9 + $0x49]]
        %v1513 = vstv %s1512
        %v1514 = vmul.f32 %v1513, %v1103
        %v1515 = vmul.f32 %v1513, %v1104
        %v1516 = vmul.f32 %v1513, %v1105
        %v1520 = vrot.slane %v1514, 2
        %v1521 = vrot.slane %v1515, 2
        %v1522 = vsel %vm537, %v1520, %v1521
        %v1523 = vrot.slane %v1516, 2
        %v1524 = vsel %vm537, %v1521, %v1523
        %v1528 = vadd.f32 %v1458, %v1522
        %v1529 = vadd.f32 %v1459, %v1524
        %v1530 = vadd.f32 %v1460, %v1523
        %s1531 = sld [smem:[#allocation9 + $0x50]]
        %v1532 = vstv %s1531
        %v1533 = vmul.f32 %v1532, %v1103
        %v1534 = vmul.f32 %v1532, %v1104
        %v1535 = vmul.f32 %v1532, %v1105
        %v1539 = vrot.slane %v1533, 2
        %v1540 = vrot.slane %v1534, 2
        %v1541 = vsel %vm537, %v1539, %v1540
        %v1542 = vrot.slane %v1535, 2
        %v1543 = vsel %vm537, %v1540, %v1542
        %v1547 = vadd.f32 %v1473, %v1541
        %v1548 = vadd.f32 %v1474, %v1543
        %v1549 = vadd.f32 %v1475, %v1542
        %s1550 = sld [smem:[#allocation9 + $0x57]]
        %v1551 = vstv %s1550
        %v1552 = vmul.f32 %v1551, %v1103
        %v1553 = vmul.f32 %v1551, %v1104
        %v1554 = vmul.f32 %v1551, %v1105
        %v1558 = vrot.slane %v1552, 2
        %v1559 = vrot.slane %v1553, 2
        %v1560 = vsel %vm537, %v1558, %v1559
        %v1561 = vrot.slane %v1554, 2
        %v1562 = vsel %vm537, %v1559, %v1561
        %v1566 = vadd.f32 %v1492, %v1560
        %v1567 = vadd.f32 %v1493, %v1562
        %v1568 = vadd.f32 %v1494, %v1561
        %s1569 = sld [smem:[#allocation9 + $0x5e]]
        %v1570 = vstv %s1569
        %v1571 = vmul.f32 %v1570, %v1103
        %v1572 = vmul.f32 %v1570, %v1104
        %v1573 = vmul.f32 %v1570, %v1105
        %v1577 = vrot.slane %v1571, 6
        %v1578 = vrot.slane %v1572, 6
        %v1579 = vsel %vm500, %v1577, %v1578
        %v1580 = vrot.slane %v1573, 6
        %v1581 = vsel %vm500, %v1578, %v1580
        %v1584 = vadd.f32 %v1510, %v1579
        %v1585 = vadd.f32 %v1511, %v1581
        %1586 = vrot.lane.b32.xlu0 %v1103, 127
        %v1587 = vpop.permute.xlu0 %1586
        %1588 = vrot.lane.b32.xlu0 %v1104, 127
        %v1589 = vpop.permute.xlu0 %1588
        %1590 = vrot.lane.b32.xlu0 %v1105, 127
        %v1591 = vpop.permute.xlu0 %1590
        %s1592 = sld [smem:[#allocation9 + $0x35]]
        %v1593 = vstv %s1592
        %v1594 = vmul.f32 %v1593, %v1587
        %v1595 = vmul.f32 %v1593, %v1589
        %v1598 = vrot.slane %v1594, 7
        %v1599 = vrot.slane %v1595, 7
        %v1600 = vsel %vm627, %v1598, %v1599
        %v1604 = vadd.f32 %v1528, %v1598
        %v1605 = vadd.f32 %v1529, %v1600
        %v1606 = vadd.f32 %v1530, %v1599
        %s1607 = sld [smem:[#allocation9 + $0x3c]]
        %v1608 = vstv %s1607
        %v1609 = vmul.f32 %v1608, %v1587
        %v1610 = vmul.f32 %v1608, %v1589
        %v1611 = vmul.f32 %v1608, %v1591
        %v1615 = vrot.slane %v1609, 7
        %v1616 = vrot.slane %v1610, 7
        %v1617 = vsel %vm627, %v1615, %v1616
        %v1618 = vrot.slane %v1611, 7
        %v1619 = vsel %vm627, %v1616, %v1618
        %v1623 = vadd.f32 %v1547, %v1615
        %v1624 = vadd.f32 %v1548, %v1617
        %v1625 = vadd.f32 %v1549, %v1619
        %s1626 = sld [smem:[#allocation9 + $0x43]]
        %v1627 = vstv %s1626
        %v1628 = vmul.f32 %v1627, %v1587
        %v1629 = vmul.f32 %v1627, %v1589
        %v1630 = vmul.f32 %v1627, %v1591
        %v1634 = vrot.slane %v1628, 7
        %v1635 = vrot.slane %v1629, 7
        %v1636 = vsel %vm627, %v1634, %v1635
        %v1637 = vrot.slane %v1630, 7
        %v1638 = vsel %vm627, %v1635, %v1637
        %v1642 = vadd.f32 %v1566, %v1634
        %v1643 = vadd.f32 %v1567, %v1636
        %v1644 = vadd.f32 %v1568, %v1638
        %s1645 = sld [smem:[#allocation9 + $0x4a]]
        %v1646 = vstv %s1645
        %v1647 = vmul.f32 %v1646, %v1587
        %v1648 = vmul.f32 %v1646, %v1589
        %v1649 = vmul.f32 %v1646, %v1591
        %v1653 = vrot.slane %v1647, 3
        %v1654 = vrot.slane %v1648, 3
        %v1655 = vsel %vm683, %v1653, %v1654
        %v1656 = vrot.slane %v1649, 3
        %v1657 = vsel %vm683, %v1654, %v1656
        %v1660 = vadd.f32 %v1584, %v1655
        %v1661 = vadd.f32 %v1585, %v1657
        %s1662 = sld [smem:[#allocation9 + $0x51]]
        %v1663 = vstv %s1662
        %v1664 = vmul.f32 %v1663, %v1587
        %v1665 = vmul.f32 %v1663, %v1589
        %v1666 = vmul.f32 %v1663, %v1591
        %v1670 = vrot.slane %v1664, 3
        %v1671 = vrot.slane %v1665, 3
        %v1672 = vsel %vm683, %v1670, %v1671
        %v1673 = vrot.slane %v1666, 3
        %v1674 = vsel %vm683, %v1671, %v1673
        %v1678 = vadd.f32 %v1604, %v1672
        %v1679 = vadd.f32 %v1605, %v1674
        %v1680 = vadd.f32 %v1606, %v1673
        %s1681 = sld [smem:[#allocation9 + $0x58]]
        %v1682 = vstv %s1681
        %v1683 = vmul.f32 %v1682, %v1587
        %v1684 = vmul.f32 %v1682, %v1589
        %v1685 = vmul.f32 %v1682, %v1591
        %v1689 = vrot.slane %v1683, 3
        %v1690 = vrot.slane %v1684, 3
        %v1691 = vsel %vm683, %v1689, %v1690
        %v1692 = vrot.slane %v1685, 3
        %v1693 = vsel %vm683, %v1690, %v1692
        %v1697 = vadd.f32 %v1623, %v1691
        %v1698 = vadd.f32 %v1624, %v1693
        %v1699 = vadd.f32 %v1625, %v1692
        %s1700 = sld [smem:[#allocation9 + $0x5f]]
        %v1701 = vstv %s1700
        %v1702 = vmul.f32 %v1701, %v1587
        %v1703 = vmul.f32 %v1701, %v1589
        %v1704 = vmul.f32 %v1701, %v1591
        %v1708 = vrot.slane %v1702, 3
        %v1709 = vrot.slane %v1703, 3
        %v1710 = vsel %vm683, %v1708, %v1709
        %v1711 = vrot.slane %v1704, 3
        %v1712 = vsel %vm683, %v1709, %v1711
        %v1716 = vadd.f32 %v1642, %v1710
        %v1717 = vadd.f32 %v1643, %v1712
        %v1718 = vadd.f32 %v1644, %v1711
        %1719 = vrot.lane.b32.xlu0 %v1103, 126
        %v1720 = vpop.permute.xlu0 %1719
        %1721 = vrot.lane.b32.xlu0 %v1104, 126
        %v1722 = vpop.permute.xlu0 %1721
        %1723 = vrot.lane.b32.xlu0 %v1105, 126
        %v1724 = vpop.permute.xlu0 %1723
        %s1725 = sld [smem:[#allocation9 + $0x36]]
        %v1726 = vstv %s1725
        %v1727 = vmul.f32 %v1726, %v1720
        %v1728 = vmul.f32 %v1726, %v1722
        %v1729 = vadd.f32 %v1660, %v1727
        %v1730 = vadd.f32 %v1661, %v1728
        %s1731 = sld [smem:[#allocation9 + $0x3d]]
        %v1732 = vstv %s1731
        %v1733 = vmul.f32 %v1732, %v1720
        %v1734 = vmul.f32 %v1732, %v1722
        %v1735 = vmul.f32 %v1732, %v1724
        %v1736 = vadd.f32 %v1678, %v1733
        %v1737 = vadd.f32 %v1679, %v1734
        %v1738 = vadd.f32 %v1680, %v1735
        %s1739 = sld [smem:[#allocation9 + $0x44]]
        %v1740 = vstv %s1739
        %v1741 = vmul.f32 %v1740, %v1720
        %v1742 = vmul.f32 %v1740, %v1722
        %v1743 = vmul.f32 %v1740, %v1724
        %v1744 = vadd.f32 %v1697, %v1741
        %v1745 = vadd.f32 %v1698, %v1742
        %v1746 = vadd.f32 %v1699, %v1743
        %s1747 = sld [smem:[#allocation9 + $0x4b]]
        %v1748 = vstv %s1747
        %v1749 = vmul.f32 %v1748, %v1720
        %v1750 = vmul.f32 %v1748, %v1722
        %v1751 = vmul.f32 %v1748, %v1724
        %v1752 = vadd.f32 %v1716, %v1749
        %v1753 = vadd.f32 %v1717, %v1750
        %v1754 = vadd.f32 %v1718, %v1751
        %s1755 = sld [smem:[#allocation9 + $0x52]]
        %v1756 = vstv %s1755
        %v1757 = vmul.f32 %v1756, %v1720
        %v1758 = vmul.f32 %v1756, %v1722
        %v1759 = vmul.f32 %v1756, %v1724
        %v1763 = vrot.slane %v1757, 4
        %v1764 = vrot.slane %v1758, 4
        %v1765 = vsel %vm307, %v1763, %v1764
        %v1766 = vrot.slane %v1759, 4
        %v1767 = vsel %vm307, %v1764, %v1766
        %v1770 = vadd.f32 %v1729, %v1765
        %v1771 = vadd.f32 %v1730, %v1767
        %s1772 = sld [smem:[#allocation9 + $0x59]]
        %v1773 = vstv %s1772
        %v1774 = vmul.f32 %v1773, %v1720
        %v1775 = vmul.f32 %v1773, %v1722
        %v1776 = vmul.f32 %v1773, %v1724
        %v1780 = vrot.slane %v1774, 4
        %v1781 = vrot.slane %v1775, 4
        %v1782 = vsel %vm307, %v1780, %v1781
        %v1783 = vrot.slane %v1776, 4
        %v1784 = vsel %vm307, %v1781, %v1783
        %v1788 = vadd.f32 %v1736, %v1782
        %v1789 = vadd.f32 %v1737, %v1784
        %v1790 = vadd.f32 %v1738, %v1783
        %s1791 = sld [smem:[#allocation9 + $0x60]]
        %v1792 = vstv %s1791
        %v1793 = vmul.f32 %v1792, %v1720
        %v1794 = vmul.f32 %v1792, %v1722
        %v1795 = vmul.f32 %v1792, %v1724
        %v1799 = vrot.slane %v1793, 4
        %v1800 = vrot.slane %v1794, 4
        %v1801 = vsel %vm307, %v1799, %v1800
        %v1802 = vrot.slane %v1795, 4
        %v1803 = vsel %vm307, %v1800, %v1802
        %v1807 = vadd.f32 %v1744, %v1801
        %v1808 = vadd.f32 %v1745, %v1803
        %v1809 = vadd.f32 %v1746, %v1802
        %1810 = vrot.lane.b32.xlu0 %v1103, 125
        %v1811 = vpop.permute.xlu0 %1810
        %1812 = vrot.lane.b32.xlu0 %v1104, 125
        %v1813 = vpop.permute.xlu0 %1812
        %1814 = vrot.lane.b32.xlu0 %v1105, 125
        %v1815 = vpop.permute.xlu0 %1814
        %s1816 = sld [smem:[#allocation9 + $0x37]]
        %v1817 = vstv %s1816
        %v1818 = vmul.f32 %v1817, %v1811
        %v1819 = vmul.f32 %v1817, %v1813
        %v1822 = vrot.slane %v1818, 5
        %v1823 = vrot.slane %v1819, 5
        %v1824 = vsel %vm367, %v1822, %v1823
        %v1828 = vadd.f32 %v1752, %v1822
        %v1829 = vadd.f32 %v1753, %v1824
        %v1830 = vadd.f32 %v1754, %v1823
        %s1831 = sld [smem:[#allocation9 + $0x3e]]
        %v1832 = vstv %s1831
        %v1833 = vmul.f32 %v1832, %v1811
        %v1834 = vmul.f32 %v1832, %v1813
        %v1835 = vmul.f32 %v1832, %v1815
        %v1839 = vrot.slane %v1833, 1
        %v1840 = vrot.slane %v1834, 1
        %v1841 = vsel %vm385, %v1839, %v1840
        %v1842 = vrot.slane %v1835, 1
        %v1843 = vsel %vm385, %v1840, %v1842
        %v1846 = vadd.f32 %v1770, %v1841
        %v1847 = vadd.f32 %v1771, %v1843
        %s1848 = sld [smem:[#allocation9 + $0x45]]
        %v1849 = vstv %s1848
        %v1850 = vmul.f32 %v1849, %v1811
        %v1851 = vmul.f32 %v1849, %v1813
        %v1852 = vmul.f32 %v1849, %v1815
        %v1856 = vrot.slane %v1850, 1
        %v1857 = vrot.slane %v1851, 1
        %v1858 = vsel %vm385, %v1856, %v1857
        %v1859 = vrot.slane %v1852, 1
        %v1860 = vsel %vm385, %v1857, %v1859
        %v1864 = vadd.f32 %v1788, %v1858
        %v1865 = vadd.f32 %v1789, %v1860
        %v1866 = vadd.f32 %v1790, %v1859
        %s1867 = sld [smem:[#allocation9 + $0x4c]]
        %v1868 = vstv %s1867
        %v1869 = vmul.f32 %v1868, %v1811
        %v1870 = vmul.f32 %v1868, %v1813
        %v1871 = vmul.f32 %v1868, %v1815
        %v1875 = vrot.slane %v1869, 1
        %v1876 = vrot.slane %v1870, 1
        %v1877 = vsel %vm385, %v1875, %v1876
        %v1878 = vrot.slane %v1871, 1
        %v1879 = vsel %vm385, %v1876, %v1878
        %v1883 = vadd.f32 %v1807, %v1877
        %v1884 = vadd.f32 %v1808, %v1879
        %v1885 = vadd.f32 %v1809, %v1878
        %s1886 = sld [smem:[#allocation9 + $0x53]]
        %v1887 = vstv %s1886
        %v1888 = vmul.f32 %v1887, %v1811
        %v1889 = vmul.f32 %v1887, %v1813
        %v1890 = vmul.f32 %v1887, %v1815
        %v1894 = vrot.slane %v1888, 1
        %v1895 = vrot.slane %v1889, 1
        %v1896 = vsel %vm385, %v1894, %v1895
        %v1897 = vrot.slane %v1890, 1
        %v1898 = vsel %vm385, %v1895, %v1897
        %v1902 = vadd.f32 %v1828, %v1896
        %v1903 = vadd.f32 %v1829, %v1898
        %v1904 = vadd.f32 %v1830, %v1897
        %s1905 = sld [smem:[#allocation9 + $0x5a]]
        %v1906 = vstv %s1905
        %v1907 = vmul.f32 %v1906, %v1811
        %v1908 = vmul.f32 %v1906, %v1813
        %v1909 = vmul.f32 %v1906, %v1815
        %v1913 = vrot.slane %v1907, 5
        %v1914 = vrot.slane %v1908, 5
        %v1915 = vsel %vm367, %v1913, %v1914
        %v1916 = vrot.slane %v1909, 5
        %v1917 = vsel %vm367, %v1914, %v1916
        %v1920 = vadd.f32 %v1846, %v1915
        %v1921 = vadd.f32 %v1847, %v1917
        %s1922 = sld [smem:[#allocation9 + $0x61]]
        %v1923 = vstv %s1922
        %v1924 = vmul.f32 %v1923, %v1811
        %v1925 = vmul.f32 %v1923, %v1813
        %v1926 = vmul.f32 %v1923, %v1815
        %v1930 = vrot.slane %v1924, 5
        %v1931 = vrot.slane %v1925, 5
        %v1932 = vsel %vm367, %v1930, %v1931
        %v1933 = vrot.slane %v1926, 5
        %v1934 = vsel %vm367, %v1931, %v1933
        %v1938 = vadd.f32 %v1864, %v1932
        %v1939 = vadd.f32 %v1865, %v1934
        %v1940 = vadd.f32 %v1866, %v1933
        %v1944 = vrot.slane %v1938, 1
        %v1945 = vrot.slane %v1939, 1
        %v1946 = vsel %vm385, %v1944, %v1945
        %v1947 = vrot.slane %v1940, 1
        %v1948 = vsel %vm385, %v1945, %v1947
        %v1951 = vadd.f32 %v1920, %v1946
        %v1952 = vadd.f32 %v1921, %v1948
        %v1956 = vrot.slane %v1902, 1
        %v1957 = vrot.slane %v1903, 1
        %v1958 = vsel %vm385, %v1956, %v1957
        %v1959 = vrot.slane %v1904, 1
        %v1960 = vsel %vm385, %v1957, %v1959
        %v1964 = vadd.f32 %v1883, %v1958
        %v1965 = vadd.f32 %v1884, %v1960
        %v1966 = vadd.f32 %v1885, %v1959
        %v1970 = vrot.slane %v1964, 2
        %v1971 = vrot.slane %v1965, 2
        %v1972 = vsel %vm537, %v1970, %v1971
        %v1973 = vrot.slane %v1966, 2
        %v1974 = vsel %vm537, %v1971, %v1973
        %v1977 = vadd.f32 %v1951, %v1972
        %v1978 = vadd.f32 %v1952, %v1974
        %v1979 = vxor.u32 %v1977, 2147483648
        %v1980 = vxor.u32 %v1978, 2147483648
        %v1981 = vmul.f32 %v1979, 1.442695
        %v1982 = vpow.pop %v1981
        %v1983 = vmul.f32 %v1980, 1.442695
        %v1984 = vpow.pop %v1983
        %v1985 = vadd.f32 %v1982, 1.0
        %v1986 = vadd.f32 %v1984, 1.0
        %v1987 = vrcp.pop %v1985
        %v1988 = vmul.f32 1.0, %v1987
        %v1989 = vrcp.pop %v1986
        %v1990 = vmul.f32 1.0, %v1989
        %1991 = vst [vmem:[%s220] sm:$0xff] %v1988
        %1992 = vst [vmem:[%s220 + $0x8] sm:$0xff] %v1990
        %s1993 = sand.u32 %s112, 1
        %s1994 = scalar_lea.sflag [#allocation7], %s1993
        %s1995 = sand.u32 %s112, 1
        %s1996 = smul.addr %s1995, 16
        %s1997 = scalar_lea.vmem [#allocation10], %s1996
        // Predicated region
        $region41: #{tpu_custom_call.1} parent=31 // pred_check
          %p1998 = pneg %p122
        $region42: #{tpu_custom_call.1} parent=31 // pred_check_branch
          %2000 = sbr.rel (%p1998) target = $region44
        $region43: #{tpu_custom_call.1} parent=31 // pred_region
          %s2002 = ssub.s32 256, 256
          %2003 = vsyncadd %s1994, %s2002
          %s2004 = smul.addr %s26, 2
          %s2005 = smul.addr %s2004, 128
          %s2006 = scalar_lea.hbm %s3, %s2005
          %s2007 = sshll.u32 %s1997, 4
          %s2008 = int_to_ptr.vmem [resolvable:$true] %s2007
          %2013 = dma.vmem_to_hbm [thread:$0]  %s2008, 256, %s2006, %s1994, 128, 128, 8
        $region44: #{tpu_custom_call.1} parent=31 // pred_fallthru
          _
      $region32: #{tpu_custom_call.1} parent=5 // pred_fallthru
        _
      %p2014 = scmp.le.s32.totalorder 2, %s17
      // Predicated region
      $region45: #{tpu_custom_call.1} parent=5 // pred_check
        %p2015 = pneg %p2014
      $region46: #{tpu_custom_call.1} parent=5 // pred_check_branch
        %2017 = sbr.rel (%p2015) target = $region48
      $region47: #{tpu_custom_call.1} parent=5 // pred_region
        %s2018 = ssub.s32 %s17, 2
        // Predicated region
        $region49: #{tpu_custom_call.1} parent=47 // pred_check
          %p2019 = pneg %p128
        $region50: #{tpu_custom_call.1} parent=47 // pred_check_branch
          %2021 = sbr.rel (%p2019) target = $region52
        $region51: #{tpu_custom_call.1} parent=47 // pred_region
          %s2022 = sand.u32 %s113, 1
          %s2023 = scalar_lea.sflag [#allocation7], %s2022
          %s2024 = sand.u32 %s113, 1
          %s2025 = smul.addr %s2024, 16
          %s2026 = scalar_lea.vmem [#allocation10], %s2025
          %2027 = dma.done %s2023, 256
        $region52: #{tpu_custom_call.1} parent=47 // pred_fallthru
          _
      $region48: #{tpu_custom_call.1} parent=5 // pred_fallthru
        _
    $region6: #{tpu_custom_call.1} parent=1 // loop_footer
      %s21 = sadd.s32 1, %s17
    $region7: #{tpu_custom_call.1} parent=1 // loop_footer_branch
      %16 = sbr.rel target = $region3
    $region8: #{tpu_custom_call.1} parent=1 // loop_exit
      _
    %2028 = vsyncpa [#allocation6], 1
    %s2029 = scalar_lea.sflag [#allocation6], 1
    %2030 = vsyncpa %s2029, 1
    %2031 = vsyncpa [#allocation7], 1
    %s2032 = scalar_lea.sflag [#allocation7], 1
    %2033 = vsyncpa %s2032, 1
    %2034 = vsyncpa [#allocation8], 1
    %s2035 = scalar_lea.sflag [#allocation8], 1
    %2036 = vsyncpa %s2035, 1

</llo_original>
